<compile_context>
chip_gen: v5e
topology: v5e:2x2
jax: 0.10.0
libtpu: 0.0.40
codegen_flags: <defaults>
</compile_context>

<pallas_src>
import functools

import jax
import jax.numpy as jnp
from jax.experimental import pallas as pl
from jax.experimental.pallas import tpu as pltpu


COUT_LANES = 128          # pad Cout to a full lane width -> lane-dense output


# ------------------------------ Pallas kernel ------------------------------

def _make_conv_relu_kernel(Bt, H, KH):
    """Fused same-conv (row-shift x Toeplitz matmul) -> +bias -> ReLU."""

    def kernel(x_ref, w_ref, b_ref, o_ref):
        # x_ref: (Bt, Hp, Wp*Cin)        bf16  zero-padded images, W & C on lanes
        # w_ref: (KH, Wp*Cin, W*Coutp)   bf16  width-Toeplitz weights (resident)
        # b_ref: (1, W*Coutp)            f32   bias tiled along W (resident)
        # o_ref: (Bt, H, W*Coutp)        f32
        acc = None
        for dy in range(KH):
            # Rows [dy, dy+H) of every image in the tile -> (Bt*H, Wp*Cin).
            lhs = jnp.concatenate(
                [x_ref[b, dy:dy + H, :] for b in range(Bt)], axis=0)
            part = jnp.dot(lhs, w_ref[dy],
                           preferred_element_type=jnp.float32)
            acc = part if acc is None else acc + part
        y = jnp.maximum(acc + b_ref[...], 0.0)          # bias + ReLU, f32
        for b in range(Bt):                             # full-width (2048-lane) stores
            o_ref[b] = y[b * H:(b + 1) * H, :].astype(o_ref.dtype)

    return kernel


# --------------------------------- wrapper ---------------------------------

def _pick_batch_tile(N, H):
    """Images per grid step: ~128 matmul rows per dot, grid>=2 when possible."""
    bt = min(N, max(1, 128 // max(H, 1)))
    while bt > 1 and N % bt:
        bt -= 1
    if bt == N and N >= 2:       # keep >=2 grid steps so both v7x TCs get work
        bt = max(d for d in range(1, N) if N % d == 0)
    return bt


def downblock_forward(params, x_nchw):
    """PyTorch DownBlock.forward: relu(conv2d(x, k=3, s=1, p=1)). x is NCHW."""
    w_hwio = params["w"]                          # (KH, KW, Cin, Cout) f32
    bias = params["b"]                            # (Cout,) f32
    KH, KW, Cin, Cout = w_hwio.shape
    PH, PW = KH // 2, KW // 2                     # odd kernels only (k=3 here)

    N, _, H, W = x_nchw.shape
    Hp, Wp = H + 2 * PH, W + 2 * PW
    Coutp = ((max(Cout, COUT_LANES) + COUT_LANES - 1) // COUT_LANES) * COUT_LANES

    # Activations: transpose + pad + flatten + cast chained -> one XLA pass,
    # then the kernel streams bf16 (Bt, Hp, Wp*Cin) blocks.
    xp = (jnp.pad(jnp.transpose(x_nchw, (0, 2, 3, 1)),
                  ((0, 0), (PH, PH), (PW, PW), (0, 0)))
          .reshape(N, Hp, Wp * Cin)
          .astype(jnp.bfloat16))

    # Width-Toeplitz weights: T[dy, (w+dx)*Cin+ci, w*Coutp+co] = W[dy,dx,ci,co].
    wpad = jnp.pad(w_hwio, ((0, 0), (0, 0), (0, 0), (0, Coutp - Cout)))
    w_flat = wpad.reshape(KH, KW * Cin, Coutp)
    T = jnp.zeros((KH, Wp * Cin, W * Coutp), jnp.float32)
    for w in range(W):                              # trace-time loop, tiny arrays
        T = T.at[:, w * Cin:w * Cin + KW * Cin,
                 w * Coutp:(w + 1) * Coutp].set(w_flat)
    T = T.astype(jnp.bfloat16)

    b_row = jnp.tile(jnp.pad(bias, (0, Coutp - Cout)).reshape(1, Coutp),
                     (1, W)).astype(jnp.float32)    # (1, W*Coutp)

    Bt = _pick_batch_tile(N, H)

    out = pl.pallas_call(
        _make_conv_relu_kernel(Bt, H, KH),
        out_shape=jax.ShapeDtypeStruct((N, H, W * Coutp), jnp.float32),
        grid=(N // Bt,),
        in_specs=[
            pl.BlockSpec((Bt, Hp, Wp * Cin), lambda n: (n, 0, 0)),        # stream imgs
            pl.BlockSpec((KH, Wp * Cin, W * Coutp), lambda n: (0, 0, 0)),  # resident W
            pl.BlockSpec((1, W * Coutp), lambda n: (0, 0)),                # resident b
        ],
        out_specs=pl.BlockSpec((Bt, H, W * Coutp), lambda n: (n, 0, 0)),
        compiler_params=pltpu.CompilerParams(
            dimension_semantics=("parallel",),
        ),
    )(xp, T, b_row)

    # (N, H, W*Coutp) -> (N, H, W, Coutp) -> drop pad channels -> NCHW.
    y = out.reshape(N, H, W, Coutp)[..., :Cout]
    return jnp.transpose(y, (0, 3, 1, 2))


# ----------------------------- reference & init -----------------------------

def reference_forward(params, x_nchw, compute_dtype=jnp.float32):
    """Pure-JAX (XLA) reference; compute_dtype controls MXU input precision."""
    x = jnp.transpose(x_nchw, (0, 2, 3, 1)).astype(compute_dtype)
    w = params["w"].astype(compute_dtype)
    y = jax.lax.conv_general_dilated(
        x, w, window_strides=(1, 1), padding=((1, 1), (1, 1)),
        dimension_numbers=("NHWC", "HWIO", "NHWC"),
        preferred_element_type=jnp.float32,
        precision=jax.lax.Precision.HIGHEST)
    y = jnp.maximum(y + params["b"].astype(jnp.float32), 0.0)
    return jnp.transpose(y, (0, 3, 1, 2))


def init_params(key, in_channels, out_channels, kh=3, kw=3):
    """Mimic PyTorch Conv2d default (uniform in +-1/sqrt(fan_in))."""
    kw_key, kb_key = jax.random.split(key)
    fan_in = in_channels * kh * kw
    bound = 1.0 / float(fan_in) ** 0.5
    w = jax.random.uniform(kw_key, (kh, kw, in_channels, out_channels),
                           jnp.float32, minval=-bound, maxval=bound)
    b = jax.random.uniform(kb_key, (out_channels,), jnp.float32,
                           minval=-bound, maxval=bound)
    return {"w": w, "b": b}


# ----------------------------------- main -----------------------------------

if __name__ == "__main__":
    key = jax.random.PRNGKey(0)
    kp, kx = jax.random.split(key)

    in_c, out_c, H, W, N = 4, 32, 16, 16, 2
    params = init_params(kp, in_c, out_c)
    x = jax.random.normal(kx, (N, in_c, H, W), jnp.float32)

    fwd = jax.jit(downblock_forward)
    out = jax.block_until_ready(fwd(params, x))
    assert out.shape == (N, out_c, H, W), out.shape

    # (1) Tight check against an XLA conv fed the same bf16-quantized operands
    #     with f32 accumulation (isolates kernel math from bf16 quantization).
    ref_bf16 = jax.block_until_ready(
        jax.jit(functools.partial(reference_forward,
                                  compute_dtype=jnp.bfloat16))(params, x))
    assert jnp.allclose(out, ref_bf16, atol=1e-3, rtol=1e-3), (
        float(jnp.max(jnp.abs(out - ref_bf16))))

    # (2) Semantics check against the full-f32 torch-faithful reference; slack
    #     budget covers bf16 input quantization (36 accumulated terms).
    ref_f32 = jax.block_until_ready(jax.jit(reference_forward)(params, x))
    assert jnp.allclose(out, ref_f32, atol=3e-2, rtol=3e-2), (
        float(jnp.max(jnp.abs(out - ref_f32))))

    print("KERNEL_OK")
</pallas_src>

<mosaic_0001>
module attributes {stable_mosaic.version = 11 : i64} {
  func.func @kernel(%arg0: i32, %arg1: memref<1x18x72xbf16, #tpu.memory_space<vmem>>, %arg2: memref<3x72x2048xbf16, #tpu.memory_space<vmem>>, %arg3: memref<1x2048xf32, #tpu.memory_space<vmem>>, %arg4: memref<1x16x2048xf32, #tpu.memory_space<vmem>>) attributes {dimension_semantics = [#tpu.dimension_semantics<parallel>], iteration_bounds = array<i64: 2>, scalar_prefetch = 0 : i64, scratch_operands = 0 : i64, tpu.core_type = #tpu.core_type<tc>, window_params = [{transform_indices = @transform_0, window_bounds = array<i64: 1, 18, 72>}, {pipeline_mode = #tpu.pipeline_mode<synchronous>, transform_indices = @transform_1, window_bounds = array<i64: 3, 72, 2048>}, {pipeline_mode = #tpu.pipeline_mode<synchronous>, transform_indices = @transform_2, window_bounds = array<i64: 1, 2048>}, {transform_indices = @transform_3, window_bounds = array<i64: 1, 16, 2048>}]} {
    %c0 = arith.constant 0 : index
    %c0_0 = arith.constant 0 : index
    %c0_1 = arith.constant 0 : index
    %0 = vector.load %arg1[%c0, %c0_0, %c0_1] : memref<1x18x72xbf16, #tpu.memory_space<vmem>>, vector<1x16x72xbf16>
    %1 = vector.shape_cast %0 : vector<1x16x72xbf16> to vector<16x72xbf16>
    %c0_2 = arith.constant 0 : index
    %c0_3 = arith.constant 0 : index
    %c0_4 = arith.constant 0 : index
    %2 = vector.load %arg2[%c0_2, %c0_3, %c0_4] : memref<3x72x2048xbf16, #tpu.memory_space<vmem>>, vector<1x72x2048xbf16>
    %3 = vector.shape_cast %2 : vector<1x72x2048xbf16> to vector<72x2048xbf16>
    %cst = arith.constant dense<0.000000e+00> : vector<16x2048xf32>
    %4 = tpu.matmul %1, %3, %cst {dimension_numbers = #tpu.dot_dimension_numbers<[1], [0], [0], [1], [0, 0, 1, 1], [], []>} : vector<16x72xbf16>, vector<72x2048xbf16>, vector<16x2048xf32> -> vector<16x2048xf32>
    %c0_5 = arith.constant 0 : index
    %c1 = arith.constant 1 : index
    %c0_6 = arith.constant 0 : index
    %5 = vector.load %arg1[%c0_5, %c1, %c0_6] : memref<1x18x72xbf16, #tpu.memory_space<vmem>>, vector<1x16x72xbf16>
    %6 = vector.shape_cast %5 : vector<1x16x72xbf16> to vector<16x72xbf16>
    %c1_7 = arith.constant 1 : index
    %c0_8 = arith.constant 0 : index
    %c0_9 = arith.constant 0 : index
    %7 = vector.load %arg2[%c1_7, %c0_8, %c0_9] : memref<3x72x2048xbf16, #tpu.memory_space<vmem>>, vector<1x72x2048xbf16>
    %8 = vector.shape_cast %7 : vector<1x72x2048xbf16> to vector<72x2048xbf16>
    %cst_10 = arith.constant dense<0.000000e+00> : vector<16x2048xf32>
    %9 = tpu.matmul %6, %8, %cst_10 {dimension_numbers = #tpu.dot_dimension_numbers<[1], [0], [0], [1], [0, 0, 1, 1], [], []>} : vector<16x72xbf16>, vector<72x2048xbf16>, vector<16x2048xf32> -> vector<16x2048xf32>
    %10 = arith.addf %4, %9 : vector<16x2048xf32>
    %c0_11 = arith.constant 0 : index
    %c2 = arith.constant 2 : index
    %c0_12 = arith.constant 0 : index
    %11 = vector.load %arg1[%c0_11, %c2, %c0_12] : memref<1x18x72xbf16, #tpu.memory_space<vmem>>, vector<1x16x72xbf16>
    %12 = vector.shape_cast %11 : vector<1x16x72xbf16> to vector<16x72xbf16>
    %c2_13 = arith.constant 2 : index
    %c0_14 = arith.constant 0 : index
    %c0_15 = arith.constant 0 : index
    %13 = vector.load %arg2[%c2_13, %c0_14, %c0_15] : memref<3x72x2048xbf16, #tpu.memory_space<vmem>>, vector<1x72x2048xbf16>
    %14 = vector.shape_cast %13 : vector<1x72x2048xbf16> to vector<72x2048xbf16>
    %cst_16 = arith.constant dense<0.000000e+00> : vector<16x2048xf32>
    %15 = tpu.matmul %12, %14, %cst_16 {dimension_numbers = #tpu.dot_dimension_numbers<[1], [0], [0], [1], [0, 0, 1, 1], [], []>} : vector<16x72xbf16>, vector<72x2048xbf16>, vector<16x2048xf32> -> vector<16x2048xf32>
    %16 = arith.addf %10, %15 : vector<16x2048xf32>
    %c0_17 = arith.constant 0 : index
    %c0_18 = arith.constant 0 : index
    %17 = vector.load %arg3[%c0_17, %c0_18] : memref<1x2048xf32, #tpu.memory_space<vmem>>, vector<1x2048xf32>
    %18 = vector.broadcast %17 : vector<1x2048xf32> to vector<16x2048xf32>
    %19 = arith.addf %16, %18 : vector<16x2048xf32>
    %cst_19 = arith.constant 0.000000e+00 : f32
    %20 = vector.broadcast %cst_19 : f32 to vector<16x2048xf32>
    %21 = arith.maximumf %19, %20 : vector<16x2048xf32>
    %c0_20 = arith.constant 0 : index
    %c0_21 = arith.constant 0 : index
    %c0_22 = arith.constant 0 : index
    %22 = vector.load %arg4[%c0_20, %c0_21, %c0_22] : memref<1x16x2048xf32, #tpu.memory_space<vmem>>, vector<1x16x2048xf32>
    %23 = vector.shape_cast %22 : vector<1x16x2048xf32> to vector<16x2048xf32>
    %24 = vector.shape_cast %21 : vector<16x2048xf32> to vector<1x16x2048xf32>
    tpu.vector_store %arg4[%c0_20, %c0_21, %c0_22], %24 {strides = array<i32>} : memref<1x16x2048xf32, #tpu.memory_space<vmem>>, vector<1x16x2048xf32>,
    return
  }
  func.func @transform_0(%arg0: i32) -> (i32, i32, i32) {
    %c0_i32 = arith.constant 0 : i32
    %c0_i32_0 = arith.constant 0 : i32
    %c0_i32_1 = arith.constant 0 : i32
    return %arg0, %c0_i32, %c0_i32_0 : i32, i32, i32
  }
  func.func @transform_1(%arg0: i32) -> (i32, i32, i32) {
    %c0_i32 = arith.constant 0 : i32
    %c0_i32_0 = arith.constant 0 : i32
    %c0_i32_1 = arith.constant 0 : i32
    %c0_i32_2 = arith.constant 0 : i32
    return %c0_i32, %c0_i32_0, %c0_i32_1 : i32, i32, i32
  }
  func.func @transform_2(%arg0: i32) -> (i32, i32) {
    %c0_i32 = arith.constant 0 : i32
    %c0_i32_0 = arith.constant 0 : i32
    %c0_i32_1 = arith.constant 0 : i32
    return %c0_i32, %c0_i32_0 : i32, i32
  }
  func.func @transform_3(%arg0: i32) -> (i32, i32, i32) {
    %c0_i32 = arith.constant 0 : i32
    %c0_i32_0 = arith.constant 0 : i32
    %c0_i32_1 = arith.constant 0 : i32
    return %arg0, %c0_i32, %c0_i32_0 : i32, i32, i32
  }
}

</mosaic_0001>

<llo_original>
// kernel: downblock_forward.1
$region0: #{downblock_forward.1}
  #allocation0 [shape = 'u32[]', space=smem, size = 0x4, offset = 0x4, fixed_abs, tag = 'smem constant byte address 0x4 - core index']
  #allocation1 [shape = 'u32[72,128]{1,0:T(1,128)}', space=vmem, size = 0x9000, scoped, tag = 'internal scratch']
  %s0 = inlined_call_operand.vmem [shape: bf16[2,18,72], index: 0, kind: input, shape index: {}]
  %s1 = inlined_call_operand.vmem [shape: bf16[3,72,2048], index: 1, kind: input, shape index: {}]
  %s2 = inlined_call_operand.vmem [shape: f32[1,2048], index: 2, kind: input, shape index: {}]
  %s3 = inlined_call_operand.vmem [shape: f32[2,16,2048], index: 3, kind: output, shape index: {}]
  %s4 = sld [smem:[#allocation0]]
  $region45: #{downblock_forward.1} parent=0
    _
  %s6 = ssub.s32 1, %s4
  %s7 = scalar_select 0, %s6, %s4
  loop: start=0, step=1, limit=4
  $region2: #{downblock_forward.1} parent=0 // loop_pre_header
    _
  $region3: #{downblock_forward.1} parent=0 // loop_header
    %s9 = sphi 0, %s13
    %p10 = scmp.ge.s32.totalorder %s9, 4
    %s19 = sphi 0, %s21
    %s22 = sphi 0, %s19
    %s23 = sphi 0, %s22
    %s39 = sphi 0, %s23
    %s43 = sphi 0, %s43
    %s45 = sphi 0, %s43
    %s46 = sphi 0, %s45
    %s60 = sphi 0, %s46
    %s64 = sphi 0, %s64
    %s66 = sphi 0, %s64
    %s67 = sphi 0, %s66
    %s81 = sphi 0, %s67
    %s87 = sphi 0, %s89
    %s90 = sphi 0, %s87
    %s91 = sphi 0, %s90
    %s107 = sphi 0, %s91
  $region4: #{downblock_forward.1} parent=0 // loop_header_branch
    %12 = sbr.rel (%p10) target = $region8
  $region5: #{downblock_forward.1} parent=0 // loop_body
    %s14 = ssub.s32 %s9, 1
    %s15 = ssub.s32 %s9, 2
    %s16 = sadd.s32 %s9, 1
    %s17 = ssub.s32 %s9, %s16
    %p18 = scmp.eq.s32.totalorder %s17, 0
    %s20 = sadd.s32 %s19, 1
    %s21 = scalar_select %p18, %s19, %s20
    %p24 = pneg %p18
    %p25 = scmp.eq.s32.totalorder %s9, 1
    %p26 = por %p24, %p25
    %p27 = scmp.ne.s32.totalorder %s19, %s22
    %p28 = scmp.eq.s32.totalorder %s9, 0
    %p29 = por %p27, %p28
    %p30 = scmp.ne.s32.totalorder %s19, %s22
    %p31 = scmp.eq.s32.totalorder %s14, 1
    %p32 = por %p30, %p31
    %p33 = scmp.ne.s32.totalorder %s22, %s23
    %p34 = scmp.eq.s32.totalorder %s14, 0
    %p35 = por %p33, %p34
    %p36 = scmp.ne.s32.totalorder %s22, %s23
    %p37 = scmp.eq.s32.totalorder %s15, 1
    %p38 = por %p36, %p37
    %p40 = scmp.ne.s32.totalorder %s23, %s39
    %p41 = scmp.eq.s32.totalorder %s15, 0
    %p42 = por %p40, %p41
    %s44 = sadd.s32 %s43, 1
    %p47 = scmp.eq.s32.totalorder %s9, 1
    %p48 = scmp.ne.s32.totalorder %s43, %s45
    %p49 = scmp.eq.s32.totalorder %s9, 0
    %p50 = por %p48, %p49
    %p51 = scmp.ne.s32.totalorder %s43, %s45
    %p52 = scmp.eq.s32.totalorder %s14, 1
    %p53 = por %p51, %p52
    %p54 = scmp.ne.s32.totalorder %s45, %s46
    %p55 = scmp.eq.s32.totalorder %s14, 0
    %p56 = por %p54, %p55
    %p57 = scmp.ne.s32.totalorder %s45, %s46
    %p58 = scmp.eq.s32.totalorder %s15, 1
    %p59 = por %p57, %p58
    %p61 = scmp.ne.s32.totalorder %s46, %s60
    %p62 = scmp.eq.s32.totalorder %s15, 0
    %p63 = por %p61, %p62
    %s65 = sadd.s32 %s64, 1
    %p68 = scmp.eq.s32.totalorder %s9, 1
    %p69 = scmp.ne.s32.totalorder %s64, %s66
    %p70 = scmp.eq.s32.totalorder %s9, 0
    %p71 = por %p69, %p70
    %p72 = scmp.ne.s32.totalorder %s64, %s66
    %p73 = scmp.eq.s32.totalorder %s14, 1
    %p74 = por %p72, %p73
    %p75 = scmp.ne.s32.totalorder %s66, %s67
    %p76 = scmp.eq.s32.totalorder %s14, 0
    %p77 = por %p75, %p76
    %p78 = scmp.ne.s32.totalorder %s66, %s67
    %p79 = scmp.eq.s32.totalorder %s15, 1
    %p80 = por %p78, %p79
    %p82 = scmp.ne.s32.totalorder %s67, %s81
    %p83 = scmp.eq.s32.totalorder %s15, 0
    %p84 = por %p82, %p83
    %s85 = ssub.s32 %s9, %s16
    %p86 = scmp.eq.s32.totalorder %s85, 0
    %s88 = sadd.s32 %s87, 1
    %s89 = scalar_select %p86, %s87, %s88
    %p92 = pneg %p86
    %p93 = scmp.eq.s32.totalorder %s9, 1
    %p94 = por %p92, %p93
    %p95 = scmp.ne.s32.totalorder %s87, %s90
    %p96 = scmp.eq.s32.totalorder %s9, 0
    %p97 = por %p95, %p96
    %p98 = scmp.ne.s32.totalorder %s87, %s90
    %p99 = scmp.eq.s32.totalorder %s14, 1
    %p100 = por %p98, %p99
    %p101 = scmp.ne.s32.totalorder %s90, %s91
    %p102 = scmp.eq.s32.totalorder %s14, 0
    %p103 = por %p101, %p102
    %p104 = scmp.ne.s32.totalorder %s90, %s91
    %p105 = scmp.eq.s32.totalorder %s15, 1
    %p106 = por %p104, %p105
    %p108 = scmp.ne.s32.totalorder %s91, %s107
    %p109 = scmp.eq.s32.totalorder %s15, 0
    %p110 = por %p108, %p109
    %p111 = scmp.le.s32.totalorder 1, %s9
    %p112 = scmp.lt.s32.totalorder %s9, 3
    %p113 = pnand %p111, %p112
    %p114 = pneg %p113
    // Predicated region
    $region9: #{downblock_forward.1} parent=5 // pred_check
      _
    $region10: #{downblock_forward.1} parent=5 // pred_check_branch
      %116 = sbr.rel (%p113) target = $region12
    $region11: #{downblock_forward.1} parent=5 // pred_region
      %s117 = ssub.s32 %s9, 1
      // Predicated region
      $region13: #{downblock_forward.1} parent=11 // pred_check
        %p118 = pneg %p56
      $region14: #{downblock_forward.1} parent=11 // pred_check_branch
        %120 = sbr.rel (%p118) target = $region16
      $region15: #{downblock_forward.1} parent=11 // pred_region
        _
      $region16: #{downblock_forward.1} parent=11 // pred_fallthru
        _
      // Predicated region
      $region17: #{downblock_forward.1} parent=11 // pred_check
        %p121 = pneg %p77
      $region18: #{downblock_forward.1} parent=11 // pred_check_branch
        %123 = sbr.rel (%p121) target = $region20
      $region19: #{downblock_forward.1} parent=11 // pred_region
        _
      $region20: #{downblock_forward.1} parent=11 // pred_fallthru
        _
    $region12: #{downblock_forward.1} parent=5 // pred_fallthru
      _
    %p124 = scmp.lt.s32.totalorder %s9, 2
    // Predicated region
    $region21: #{downblock_forward.1} parent=5 // pred_check
      %p125 = pneg %p124
    $region22: #{downblock_forward.1} parent=5 // pred_check_branch
      %127 = sbr.rel (%p125) target = $region24
    $region23: #{downblock_forward.1} parent=5 // pred_region
      // Predicated region
      $region25: #{downblock_forward.1} parent=23 // pred_check
        %p128 = pneg %p29
      $region26: #{downblock_forward.1} parent=23 // pred_check_branch
        %130 = sbr.rel (%p128) target = $region28
      $region27: #{downblock_forward.1} parent=23 // pred_region
        %p131 = scmp.lt.s32.totalorder %s9, 1
        %s132 = scalar_select %p131, %s9, 1
        %s133 = smul.addr %s132, 3
        %s134 = smul.addr %s133, 4
        %s135 = scalar_lea.vmem %s0, %s134
      $region28: #{downblock_forward.1} parent=23 // pred_fallthru
        _
    $region24: #{downblock_forward.1} parent=5 // pred_fallthru
      _
    %p136 = scmp.le.s32.totalorder 1, %s9
    %p137 = scmp.lt.s32.totalorder %s9, 3
    %p138 = pnand %p136, %p137
    %p139 = pneg %p138
    // Predicated region
    $region29: #{downblock_forward.1} parent=5 // pred_check
      _
    $region30: #{downblock_forward.1} parent=5 // pred_check_branch
      %141 = sbr.rel (%p138) target = $region32
    $region31: #{downblock_forward.1} parent=5 // pred_region
      %s142 = ssub.s32 %s9, 1
      %p143 = scmp.lt.s32.totalorder %s14, 1
      %s144 = scalar_select %p143, %s14, 1
      %s145 = smul.addr %s144, 3
      %s146 = smul.addr %s145, 4
      %s147 = scalar_lea.vmem %s0, %s146
      %p148 = pneg %p35
      %p149 = pneg %p32
      %p150 = pneg %p56
      %p151 = pneg %p53
      %p152 = pneg %p77
      %p153 = pneg %p74
      %p154 = pneg %p103
      %p155 = pneg %p100
      %p156 = scmp.lt.s32.totalorder %s14, 1
      %s157 = scalar_select %p156, %s14, 1
      %s158 = smul.addr %s157, 32
      %s159 = smul.addr %s158, 8
      %s160 = scalar_lea.vmem %s3, %s159
      %p161 = scmp.lt.s32.totalorder %s14, 1
      %s162 = scalar_select %p161, %s14, 1
      %s163 = smul.addr %s162, 3
      %s164 = smul.addr %s163, 4
      %s165 = scalar_lea.vmem %s0, %s164
      %p166 = scmp.lt.s32.totalorder %s14, 1
      %s167 = scalar_select %p166, %s14, 1
      %s168 = smul.addr %s167, 32
      %s169 = smul.addr %s168, 8
      %s170 = scalar_lea.vmem %s3, %s169
      %v172 = vld [vmem:[%s165] sm:$0xf]
      %v173 = vld [vmem:[%s165 + $0x4] sm:$0xf]
      %v174 = vld [vmem:[%s1] sm:$0xff]
      %v175 = vld [vmem:[%s1 + $0x8] sm:$0xff]
      %v176 = vld [vmem:[%s1 + $0x10] sm:$0xff]
      %v177 = vld [vmem:[%s1 + $0x18] sm:$0xff]
      %v178 = vld [vmem:[%s1 + $0x20] sm:$0xff]
      %v179 = vld [vmem:[%s1 + $0x28] sm:$0xff]
      %v180 = vld [vmem:[%s1 + $0x30] sm:$0xff]
      %v181 = vld [vmem:[%s1 + $0x38] sm:$0xff]
      %v182 = vld [vmem:[%s1 + $0x40] sm:$0xff]
      %v183 = vld [vmem:[%s1 + $0x48] sm:$0xff]
      %v184 = vld [vmem:[%s1 + $0x50] sm:$0xff]
      %v185 = vld [vmem:[%s1 + $0x58] sm:$0xff]
      %v186 = vld [vmem:[%s1 + $0x60] sm:$0xff]
      %v187 = vld [vmem:[%s1 + $0x68] sm:$0xff]
      %v188 = vld [vmem:[%s1 + $0x70] sm:$0xff]
      %v189 = vld [vmem:[%s1 + $0x78] sm:$0xff]
      %v190 = vld [vmem:[%s1 + $0x80] sm:$0xff]
      %v191 = vld [vmem:[%s1 + $0x88] sm:$0xff]
      %v192 = vld [vmem:[%s1 + $0x90] sm:$0xff]
      %v193 = vld [vmem:[%s1 + $0x98] sm:$0xff]
      %v194 = vld [vmem:[%s1 + $0xa0] sm:$0xff]
      %v195 = vld [vmem:[%s1 + $0xa8] sm:$0xff]
      %v196 = vld [vmem:[%s1 + $0xb0] sm:$0xff]
      %v197 = vld [vmem:[%s1 + $0xb8] sm:$0xff]
      %v198 = vld [vmem:[%s1 + $0xc0] sm:$0xff]
      %v199 = vld [vmem:[%s1 + $0xc8] sm:$0xff]
      %v200 = vld [vmem:[%s1 + $0xd0] sm:$0xff]
      %v201 = vld [vmem:[%s1 + $0xd8] sm:$0xff]
      %v202 = vld [vmem:[%s1 + $0xe0] sm:$0xff]
      %v203 = vld [vmem:[%s1 + $0xe8] sm:$0xff]
      %v204 = vld [vmem:[%s1 + $0xf0] sm:$0xff]
      %v205 = vld [vmem:[%s1 + $0xf8] sm:$0xff]
      %v206 = vld [vmem:[%s1 + $0x100] sm:$0xff]
      %v207 = vld [vmem:[%s1 + $0x108] sm:$0xff]
      %v208 = vld [vmem:[%s1 + $0x110] sm:$0xff]
      %v209 = vld [vmem:[%s1 + $0x118] sm:$0xff]
      %v210 = vld [vmem:[%s1 + $0x120] sm:$0xff]
      %v211 = vld [vmem:[%s1 + $0x128] sm:$0xff]
      %v212 = vld [vmem:[%s1 + $0x130] sm:$0xff]
      %v213 = vld [vmem:[%s1 + $0x138] sm:$0xff]
      %v214 = vld [vmem:[%s1 + $0x140] sm:$0xff]
      %v215 = vld [vmem:[%s1 + $0x148] sm:$0xff]
      %v216 = vld [vmem:[%s1 + $0x150] sm:$0xff]
      %v217 = vld [vmem:[%s1 + $0x158] sm:$0xff]
      %v218 = vld [vmem:[%s1 + $0x160] sm:$0xff]
      %v219 = vld [vmem:[%s1 + $0x168] sm:$0xff]
      %v220 = vld [vmem:[%s1 + $0x170] sm:$0xff]
      %v221 = vld [vmem:[%s1 + $0x178] sm:$0xff]
      %v222 = vld [vmem:[%s1 + $0x180] sm:$0xff]
      %v223 = vld [vmem:[%s1 + $0x188] sm:$0xff]
      %v224 = vld [vmem:[%s1 + $0x190] sm:$0xff]
      %v225 = vld [vmem:[%s1 + $0x198] sm:$0xff]
      %v226 = vld [vmem:[%s1 + $0x1a0] sm:$0xff]
      %v227 = vld [vmem:[%s1 + $0x1a8] sm:$0xff]
      %v228 = vld [vmem:[%s1 + $0x1b0] sm:$0xff]
      %v229 = vld [vmem:[%s1 + $0x1b8] sm:$0xff]
      %v230 = vld [vmem:[%s1 + $0x1c0] sm:$0xff]
      %v231 = vld [vmem:[%s1 + $0x1c8] sm:$0xff]
      %v232 = vld [vmem:[%s1 + $0x1d0] sm:$0xff]
      %v233 = vld [vmem:[%s1 + $0x1d8] sm:$0xff]
      %v234 = vld [vmem:[%s1 + $0x1e0] sm:$0xff]
      %v235 = vld [vmem:[%s1 + $0x1e8] sm:$0xff]
      %v236 = vld [vmem:[%s1 + $0x1f0] sm:$0xff]
      %v237 = vld [vmem:[%s1 + $0x1f8] sm:$0xff]
      %v238 = vld [vmem:[%s1 + $0x200] sm:$0xff]
      %v239 = vld [vmem:[%s1 + $0x208] sm:$0xff]
      %v240 = vld [vmem:[%s1 + $0x210] sm:$0xff]
      %v241 = vld [vmem:[%s1 + $0x218] sm:$0xff]
      %v242 = vld [vmem:[%s1 + $0x220] sm:$0xff]
      %v243 = vld [vmem:[%s1 + $0x228] sm:$0xff]
      %v244 = vld [vmem:[%s1 + $0x230] sm:$0xff]
      %v245 = vld [vmem:[%s1 + $0x238] sm:$0xff]
      %v246 = vld [vmem:[%s165 + $0x8] sm:$0x1]
      %s247 = scalar_lea.vmem %s1, 576
      %v248 = vld [vmem:[%s247] sm:$0xff]
      %v249 = vld [vmem:[%s247 + $0x8] sm:$0xff]
      %v250 = vld [vmem:[%s247 + $0x10] sm:$0xff]
      %v251 = vld [vmem:[%s247 + $0x18] sm:$0xff]
      %v252 = vld [vmem:[%s247 + $0x20] sm:$0xff]
      %v253 = vld [vmem:[%s247 + $0x28] sm:$0xff]
      %v254 = vld [vmem:[%s247 + $0x30] sm:$0xff]
      %v255 = vld [vmem:[%s247 + $0x38] sm:$0xff]
      %v256 = vld [vmem:[%s247 + $0x40] sm:$0xff]
      %v257 = vld [vmem:[%s247 + $0x48] sm:$0xff]
      %v258 = vld [vmem:[%s247 + $0x50] sm:$0xff]
      %v259 = vld [vmem:[%s247 + $0x58] sm:$0xff]
      %v260 = vld [vmem:[%s247 + $0x60] sm:$0xff]
      %v261 = vld [vmem:[%s247 + $0x68] sm:$0xff]
      %v262 = vld [vmem:[%s247 + $0x70] sm:$0xff]
      %v263 = vld [vmem:[%s247 + $0x78] sm:$0xff]
      %v264 = vld [vmem:[%s247 + $0x80] sm:$0xff]
      %v265 = vld [vmem:[%s247 + $0x88] sm:$0xff]
      %v266 = vld [vmem:[%s247 + $0x90] sm:$0xff]
      %v267 = vld [vmem:[%s247 + $0x98] sm:$0xff]
      %v268 = vld [vmem:[%s247 + $0xa0] sm:$0xff]
      %v269 = vld [vmem:[%s247 + $0xa8] sm:$0xff]
      %v270 = vld [vmem:[%s247 + $0xb0] sm:$0xff]
      %v271 = vld [vmem:[%s247 + $0xb8] sm:$0xff]
      %v272 = vld [vmem:[%s247 + $0xc0] sm:$0xff]
      %v273 = vld [vmem:[%s247 + $0xc8] sm:$0xff]
      %v274 = vld [vmem:[%s247 + $0xd0] sm:$0xff]
      %v275 = vld [vmem:[%s247 + $0xd8] sm:$0xff]
      %v276 = vld [vmem:[%s247 + $0xe0] sm:$0xff]
      %v277 = vld [vmem:[%s247 + $0xe8] sm:$0xff]
      %v278 = vld [vmem:[%s247 + $0xf0] sm:$0xff]
      %v279 = vld [vmem:[%s247 + $0xf8] sm:$0xff]
      %v280 = vld [vmem:[%s247 + $0x100] sm:$0xff]
      %v281 = vld [vmem:[%s247 + $0x108] sm:$0xff]
      %v282 = vld [vmem:[%s247 + $0x110] sm:$0xff]
      %v283 = vld [vmem:[%s247 + $0x118] sm:$0xff]
      %v284 = vld [vmem:[%s247 + $0x120] sm:$0xff]
      %v285 = vld [vmem:[%s247 + $0x128] sm:$0xff]
      %v286 = vld [vmem:[%s247 + $0x130] sm:$0xff]
      %v287 = vld [vmem:[%s247 + $0x138] sm:$0xff]
      %v288 = vld [vmem:[%s247 + $0x140] sm:$0xff]
      %v289 = vld [vmem:[%s247 + $0x148] sm:$0xff]
      %v290 = vld [vmem:[%s247 + $0x150] sm:$0xff]
      %v291 = vld [vmem:[%s247 + $0x158] sm:$0xff]
      %v292 = vld [vmem:[%s247 + $0x160] sm:$0xff]
      %v293 = vld [vmem:[%s247 + $0x168] sm:$0xff]
      %v294 = vld [vmem:[%s247 + $0x170] sm:$0xff]
      %v295 = vld [vmem:[%s247 + $0x178] sm:$0xff]
      %v296 = vld [vmem:[%s247 + $0x180] sm:$0xff]
      %v297 = vld [vmem:[%s247 + $0x188] sm:$0xff]
      %v298 = vld [vmem:[%s247 + $0x190] sm:$0xff]
      %v299 = vld [vmem:[%s247 + $0x198] sm:$0xff]
      %v300 = vld [vmem:[%s247 + $0x1a0] sm:$0xff]
      %v301 = vld [vmem:[%s247 + $0x1a8] sm:$0xff]
      %v302 = vld [vmem:[%s247 + $0x1b0] sm:$0xff]
      %v303 = vld [vmem:[%s247 + $0x1b8] sm:$0xff]
      %v304 = vld [vmem:[%s247 + $0x1c0] sm:$0xff]
      %v305 = vld [vmem:[%s247 + $0x1c8] sm:$0xff]
      %v306 = vld [vmem:[%s247 + $0x1d0] sm:$0xff]
      %v307 = vld [vmem:[%s247 + $0x1d8] sm:$0xff]
      %v308 = vld [vmem:[%s247 + $0x1e0] sm:$0xff]
      %v309 = vld [vmem:[%s247 + $0x1e8] sm:$0xff]
      %v310 = vld [vmem:[%s247 + $0x1f0] sm:$0xff]
      %v311 = vld [vmem:[%s247 + $0x1f8] sm:$0xff]
      %v312 = vld [vmem:[%s247 + $0x200] sm:$0xff]
      %v313 = vld [vmem:[%s247 + $0x208] sm:$0xff]
      %v314 = vld [vmem:[%s247 + $0x210] sm:$0xff]
      %v315 = vld [vmem:[%s247 + $0x218] sm:$0xff]
      %v316 = vld [vmem:[%s247 + $0x220] sm:$0xff]
      %v317 = vld [vmem:[%s247 + $0x228] sm:$0xff]
      %v318 = vld [vmem:[%s247 + $0x230] sm:$0xff]
      %v319 = vld [vmem:[%s247 + $0x238] sm:$0xff]
      %v323 = vunpack.c.l.b16 %v172
      %v324 = vunpack.c.l.b16 %v173
      %v325 = vunpack.c.l.b16 %v246
      %v326 = vpack.c.b16 %v324, %v323
      %v327 = vpack.c.b16 %v325, %v325
      %vm328 = vsmask.f32 7424
      %v330 = vshrl.u32 %v326, 16
      %v332 = vshll.u32 %v326, 16
      %v334 = vrot.slane %v332, 1
      %v335 = vor.u32 %v330, %v334
      %v337 = vshll.u32 %v327, 16
      %v339 = vrot.slane %v337, 1
      %v340 = vsel %vm328, %v335, %v339
      %v413 = vunpack.c.l.b16 %v248
      %v414 = vunpack.c.h.b16 %v248
      %v415 = vunpack.c.l.b16 %v249
      %v416 = vunpack.c.h.b16 %v249
      %v417 = vunpack.c.l.b16 %v250
      %v418 = vunpack.c.h.b16 %v250
      %v419 = vunpack.c.l.b16 %v251
      %v420 = vunpack.c.h.b16 %v251
      %v421 = vunpack.c.l.b16 %v252
      %v422 = vunpack.c.h.b16 %v252
      %v423 = vunpack.c.l.b16 %v253
      %v424 = vunpack.c.h.b16 %v253
      %v425 = vunpack.c.l.b16 %v254
      %v426 = vunpack.c.h.b16 %v254
      %v427 = vunpack.c.l.b16 %v255
      %v428 = vunpack.c.h.b16 %v255
      %v429 = vunpack.c.l.b16 %v256
      %v430 = vunpack.c.h.b16 %v256
      %v431 = vunpack.c.l.b16 %v257
      %v432 = vunpack.c.h.b16 %v257
      %v433 = vunpack.c.l.b16 %v258
      %v434 = vunpack.c.h.b16 %v258
      %v435 = vunpack.c.l.b16 %v259
      %v436 = vunpack.c.h.b16 %v259
      %v437 = vunpack.c.l.b16 %v260
      %v438 = vunpack.c.h.b16 %v260
      %v439 = vunpack.c.l.b16 %v261
      %v440 = vunpack.c.h.b16 %v261
      %v441 = vunpack.c.l.b16 %v262
      %v442 = vunpack.c.h.b16 %v262
      %v443 = vunpack.c.l.b16 %v263
      %v444 = vunpack.c.h.b16 %v263
      %v445 = vunpack.c.l.b16 %v264
      %v446 = vunpack.c.h.b16 %v264
      %v447 = vunpack.c.l.b16 %v265
      %v448 = vunpack.c.h.b16 %v265
      %v449 = vunpack.c.l.b16 %v266
      %v450 = vunpack.c.h.b16 %v266
      %v451 = vunpack.c.l.b16 %v267
      %v452 = vunpack.c.h.b16 %v267
      %v453 = vunpack.c.l.b16 %v268
      %v454 = vunpack.c.h.b16 %v268
      %v455 = vunpack.c.l.b16 %v269
      %v456 = vunpack.c.h.b16 %v269
      %v457 = vunpack.c.l.b16 %v270
      %v458 = vunpack.c.h.b16 %v270
      %v459 = vunpack.c.l.b16 %v271
      %v460 = vunpack.c.h.b16 %v271
      %v461 = vunpack.c.l.b16 %v272
      %v462 = vunpack.c.h.b16 %v272
      %v463 = vunpack.c.l.b16 %v273
      %v464 = vunpack.c.h.b16 %v273
      %v465 = vunpack.c.l.b16 %v274
      %v466 = vunpack.c.h.b16 %v274
      %v467 = vunpack.c.l.b16 %v275
      %v468 = vunpack.c.h.b16 %v275
      %v469 = vunpack.c.l.b16 %v276
      %v470 = vunpack.c.h.b16 %v276
      %v471 = vunpack.c.l.b16 %v277
      %v472 = vunpack.c.h.b16 %v277
      %v473 = vunpack.c.l.b16 %v278
      %v474 = vunpack.c.h.b16 %v278
      %v475 = vunpack.c.l.b16 %v279
      %v476 = vunpack.c.h.b16 %v279
      %v477 = vunpack.c.l.b16 %v280
      %v478 = vunpack.c.h.b16 %v280
      %v479 = vunpack.c.l.b16 %v281
      %v480 = vunpack.c.h.b16 %v281
      %v481 = vunpack.c.l.b16 %v282
      %v482 = vunpack.c.h.b16 %v282
      %v483 = vunpack.c.l.b16 %v283
      %v484 = vunpack.c.h.b16 %v283
      %v485 = vunpack.c.l.b16 %v284
      %v486 = vunpack.c.h.b16 %v284
      %v487 = vunpack.c.l.b16 %v285
      %v488 = vunpack.c.h.b16 %v285
      %v489 = vunpack.c.l.b16 %v286
      %v490 = vunpack.c.h.b16 %v286
      %v491 = vunpack.c.l.b16 %v287
      %v492 = vunpack.c.h.b16 %v287
      %v493 = vunpack.c.l.b16 %v288
      %v494 = vunpack.c.h.b16 %v288
      %v495 = vunpack.c.l.b16 %v289
      %v496 = vunpack.c.h.b16 %v289
      %v497 = vunpack.c.l.b16 %v290
      %v498 = vunpack.c.h.b16 %v290
      %v499 = vunpack.c.l.b16 %v291
      %v500 = vunpack.c.h.b16 %v291
      %v501 = vunpack.c.l.b16 %v292
      %v502 = vunpack.c.h.b16 %v292
      %v503 = vunpack.c.l.b16 %v293
      %v504 = vunpack.c.h.b16 %v293
      %v505 = vunpack.c.l.b16 %v294
      %v506 = vunpack.c.h.b16 %v294
      %v507 = vunpack.c.l.b16 %v295
      %v508 = vunpack.c.h.b16 %v295
      %v509 = vunpack.c.l.b16 %v296
      %v510 = vunpack.c.h.b16 %v296
      %v511 = vunpack.c.l.b16 %v297
      %v512 = vunpack.c.h.b16 %v297
      %v513 = vunpack.c.l.b16 %v298
      %v514 = vunpack.c.h.b16 %v298
      %v515 = vunpack.c.l.b16 %v299
      %v516 = vunpack.c.h.b16 %v299
      %v517 = vunpack.c.l.b16 %v300
      %v518 = vunpack.c.h.b16 %v300
      %v519 = vunpack.c.l.b16 %v301
      %v520 = vunpack.c.h.b16 %v301
      %v521 = vunpack.c.l.b16 %v302
      %v522 = vunpack.c.h.b16 %v302
      %v523 = vunpack.c.l.b16 %v303
      %v524 = vunpack.c.h.b16 %v303
      %v525 = vunpack.c.l.b16 %v304
      %v526 = vunpack.c.h.b16 %v304
      %v527 = vunpack.c.l.b16 %v305
      %v528 = vunpack.c.h.b16 %v305
      %v529 = vunpack.c.l.b16 %v306
      %v530 = vunpack.c.h.b16 %v306
      %v531 = vunpack.c.l.b16 %v307
      %v532 = vunpack.c.h.b16 %v307
      %v533 = vunpack.c.l.b16 %v308
      %v534 = vunpack.c.h.b16 %v308
      %v535 = vunpack.c.l.b16 %v309
      %v536 = vunpack.c.h.b16 %v309
      %v537 = vunpack.c.l.b16 %v310
      %v538 = vunpack.c.h.b16 %v310
      %v539 = vunpack.c.l.b16 %v311
      %v540 = vunpack.c.h.b16 %v311
      %v541 = vunpack.c.l.b16 %v312
      %v542 = vunpack.c.h.b16 %v312
      %v543 = vunpack.c.l.b16 %v313
      %v544 = vunpack.c.h.b16 %v313
      %v545 = vunpack.c.l.b16 %v314
      %v546 = vunpack.c.h.b16 %v314
      %v547 = vunpack.c.l.b16 %v315
      %v548 = vunpack.c.h.b16 %v315
      %v549 = vunpack.c.l.b16 %v316
      %v550 = vunpack.c.h.b16 %v316
      %v551 = vunpack.c.l.b16 %v317
      %v552 = vunpack.c.h.b16 %v317
      %v553 = vunpack.c.l.b16 %v318
      %v554 = vunpack.c.h.b16 %v318
      %v555 = vunpack.c.l.b16 %v319
      %v556 = vunpack.c.h.b16 %v319
      %v557 = vpack.c.b16 %v429, %v413
      %v558 = vpack.c.b16 %v430, %v414
      %v559 = vpack.c.b16 %v431, %v415
      %v560 = vpack.c.b16 %v432, %v416
      %v561 = vpack.c.b16 %v433, %v417
      %v562 = vpack.c.b16 %v434, %v418
      %v563 = vpack.c.b16 %v435, %v419
      %v564 = vpack.c.b16 %v436, %v420
      %v565 = vpack.c.b16 %v437, %v421
      %v566 = vpack.c.b16 %v438, %v422
      %v567 = vpack.c.b16 %v439, %v423
      %v568 = vpack.c.b16 %v440, %v424
      %v569 = vpack.c.b16 %v441, %v425
      %v570 = vpack.c.b16 %v442, %v426
      %v571 = vpack.c.b16 %v443, %v427
      %v572 = vpack.c.b16 %v444, %v428
      %v573 = vpack.c.b16 %v461, %v445
      %v574 = vpack.c.b16 %v462, %v446
      %v575 = vpack.c.b16 %v463, %v447
      %v576 = vpack.c.b16 %v464, %v448
      %v577 = vpack.c.b16 %v465, %v449
      %v578 = vpack.c.b16 %v466, %v450
      %v579 = vpack.c.b16 %v467, %v451
      %v580 = vpack.c.b16 %v468, %v452
      %v581 = vpack.c.b16 %v469, %v453
      %v582 = vpack.c.b16 %v470, %v454
      %v583 = vpack.c.b16 %v471, %v455
      %v584 = vpack.c.b16 %v472, %v456
      %v585 = vpack.c.b16 %v473, %v457
      %v586 = vpack.c.b16 %v474, %v458
      %v587 = vpack.c.b16 %v475, %v459
      %v588 = vpack.c.b16 %v476, %v460
      %v589 = vpack.c.b16 %v493, %v477
      %v590 = vpack.c.b16 %v494, %v478
      %v591 = vpack.c.b16 %v495, %v479
      %v592 = vpack.c.b16 %v496, %v480
      %v593 = vpack.c.b16 %v497, %v481
      %v594 = vpack.c.b16 %v498, %v482
      %v595 = vpack.c.b16 %v499, %v483
      %v596 = vpack.c.b16 %v500, %v484
      %v597 = vpack.c.b16 %v501, %v485
      %v598 = vpack.c.b16 %v502, %v486
      %v599 = vpack.c.b16 %v503, %v487
      %v600 = vpack.c.b16 %v504, %v488
      %v601 = vpack.c.b16 %v505, %v489
      %v602 = vpack.c.b16 %v506, %v490
      %v603 = vpack.c.b16 %v507, %v491
      %v604 = vpack.c.b16 %v508, %v492
      %v605 = vpack.c.b16 %v525, %v509
      %v606 = vpack.c.b16 %v526, %v510
      %v607 = vpack.c.b16 %v527, %v511
      %v608 = vpack.c.b16 %v528, %v512
      %v609 = vpack.c.b16 %v529, %v513
      %v610 = vpack.c.b16 %v530, %v514
      %v611 = vpack.c.b16 %v531, %v515
      %v612 = vpack.c.b16 %v532, %v516
      %v613 = vpack.c.b16 %v533, %v517
      %v614 = vpack.c.b16 %v534, %v518
      %v615 = vpack.c.b16 %v535, %v519
      %v616 = vpack.c.b16 %v536, %v520
      %v617 = vpack.c.b16 %v537, %v521
      %v618 = vpack.c.b16 %v538, %v522
      %v619 = vpack.c.b16 %v539, %v523
      %v620 = vpack.c.b16 %v540, %v524
      %v621 = vpack.c.b16 %v541, %v541
      %v622 = vpack.c.b16 %v542, %v542
      %v623 = vpack.c.b16 %v543, %v543
      %v624 = vpack.c.b16 %v544, %v544
      %v625 = vpack.c.b16 %v545, %v545
      %v626 = vpack.c.b16 %v546, %v546
      %v627 = vpack.c.b16 %v547, %v547
      %v628 = vpack.c.b16 %v548, %v548
      %v629 = vpack.c.b16 %v549, %v549
      %v630 = vpack.c.b16 %v550, %v550
      %v631 = vpack.c.b16 %v551, %v551
      %v632 = vpack.c.b16 %v552, %v552
      %v633 = vpack.c.b16 %v553, %v553
      %v634 = vpack.c.b16 %v554, %v554
      %v635 = vpack.c.b16 %v555, %v555
      %v636 = vpack.c.b16 %v556, %v556
      %vm701 = vcmask 588800
      %v703 = vsel %vm701, %v340, 0
      %vm705 = vcmask 1043456
      %v707 = vsel %vm705, %v621, 0
      %v710 = vsel %vm705, %v622, 0
      %v713 = vsel %vm705, %v623, 0
      %v716 = vsel %vm705, %v624, 0
      %v719 = vsel %vm705, %v625, 0
      %v722 = vsel %vm705, %v626, 0
      %v725 = vsel %vm705, %v627, 0
      %v728 = vsel %vm705, %v628, 0
      %v731 = vsel %vm705, %v629, 0
      %v734 = vsel %vm705, %v630, 0
      %v737 = vsel %vm705, %v631, 0
      %v740 = vsel %vm705, %v632, 0
      %v743 = vsel %vm705, %v633, 0
      %v746 = vsel %vm705, %v634, 0
      %v749 = vsel %vm705, %v635, 0
      %v752 = vsel %vm705, %v636, 0
      %754 = vmatpush.bf16.msra.mxu0 0
      %755 = vmatpush.bf16.msra.mxu0 0
      %756 = vmatpush.bf16.msra.mxu0 0
      %757 = vmatpush.bf16.msra.mxu0 %v707
      %758 = vmatpush.bf16.msra.mxu0 %v605
      %759 = vmatpush.bf16.msra.mxu0 %v589
      %760 = vmatpush.bf16.msra.mxu0 %v573
      %761 = vmatpush.bf16.msra.mxu0 %v557
      %762 = vmatmul.bf16.gmra.mxu0 %v703
      %v763 = vpop.f32.mrf.mxu0
      %v764 = vadd.f32 0.0, %v763
      %v765 = vpop.f32.mrf.mxu0
      %v766 = vadd.f32 0.0, %v765
      %767 = vdwg.mxu0
      %768 = vmatpush.bf16.msra.mxu0 0
      %769 = vmatpush.bf16.msra.mxu0 0
      %770 = vmatpush.bf16.msra.mxu0 0
      %771 = vmatpush.bf16.msra.mxu0 %v710
      %772 = vmatpush.bf16.msra.mxu0 %v606
      %773 = vmatpush.bf16.msra.mxu0 %v590
      %774 = vmatpush.bf16.msra.mxu0 %v574
      %775 = vmatpush.bf16.msra.mxu0 %v558
      %776 = vmatmul.bf16.gmra.mxu0 %v703
      %v777 = vpop.f32.mrf.mxu0
      %v778 = vadd.f32 0.0, %v777
      %v779 = vpop.f32.mrf.mxu0
      %v780 = vadd.f32 0.0, %v779
      %781 = vdwg.mxu0
      %782 = vmatpush.bf16.msra.mxu0 0
      %783 = vmatpush.bf16.msra.mxu0 0
      %784 = vmatpush.bf16.msra.mxu0 0
      %785 = vmatpush.bf16.msra.mxu0 %v713
      %786 = vmatpush.bf16.msra.mxu0 %v607
      %787 = vmatpush.bf16.msra.mxu0 %v591
      %788 = vmatpush.bf16.msra.mxu0 %v575
      %789 = vmatpush.bf16.msra.mxu0 %v559
      %790 = vmatmul.bf16.gmra.mxu0 %v703
      %v791 = vpop.f32.mrf.mxu0
      %v792 = vadd.f32 0.0, %v791
      %v793 = vpop.f32.mrf.mxu0
      %v794 = vadd.f32 0.0, %v793
      %795 = vdwg.mxu0
      %796 = vmatpush.bf16.msra.mxu0 0
      %797 = vmatpush.bf16.msra.mxu0 0
      %798 = vmatpush.bf16.msra.mxu0 0
      %799 = vmatpush.bf16.msra.mxu0 %v716
      %800 = vmatpush.bf16.msra.mxu0 %v608
      %801 = vmatpush.bf16.msra.mxu0 %v592
      %802 = vmatpush.bf16.msra.mxu0 %v576
      %803 = vmatpush.bf16.msra.mxu0 %v560
      %804 = vmatmul.bf16.gmra.mxu0 %v703
      %v805 = vpop.f32.mrf.mxu0
      %v806 = vadd.f32 0.0, %v805
      %v807 = vpop.f32.mrf.mxu0
      %v808 = vadd.f32 0.0, %v807
      %809 = vdwg.mxu0
      %810 = vmatpush.bf16.msra.mxu0 0
      %811 = vmatpush.bf16.msra.mxu0 0
      %812 = vmatpush.bf16.msra.mxu0 0
      %813 = vmatpush.bf16.msra.mxu0 %v719
      %814 = vmatpush.bf16.msra.mxu0 %v609
      %815 = vmatpush.bf16.msra.mxu0 %v593
      %816 = vmatpush.bf16.msra.mxu0 %v577
      %817 = vmatpush.bf16.msra.mxu0 %v561
      %818 = vmatmul.bf16.gmra.mxu0 %v703
      %v819 = vpop.f32.mrf.mxu0
      %v820 = vadd.f32 0.0, %v819
      %v821 = vpop.f32.mrf.mxu0
      %v822 = vadd.f32 0.0, %v821
      %823 = vdwg.mxu0
      %824 = vmatpush.bf16.msra.mxu0 0
      %825 = vmatpush.bf16.msra.mxu0 0
      %826 = vmatpush.bf16.msra.mxu0 0
      %827 = vmatpush.bf16.msra.mxu0 %v722
      %828 = vmatpush.bf16.msra.mxu0 %v610
      %829 = vmatpush.bf16.msra.mxu0 %v594
      %830 = vmatpush.bf16.msra.mxu0 %v578
      %831 = vmatpush.bf16.msra.mxu0 %v562
      %832 = vmatmul.bf16.gmra.mxu0 %v703
      %v833 = vpop.f32.mrf.mxu0
      %v834 = vadd.f32 0.0, %v833
      %v835 = vpop.f32.mrf.mxu0
      %v836 = vadd.f32 0.0, %v835
      %837 = vdwg.mxu0
      %838 = vmatpush.bf16.msra.mxu0 0
      %839 = vmatpush.bf16.msra.mxu0 0
      %840 = vmatpush.bf16.msra.mxu0 0
      %841 = vmatpush.bf16.msra.mxu0 %v725
      %842 = vmatpush.bf16.msra.mxu0 %v611
      %843 = vmatpush.bf16.msra.mxu0 %v595
      %844 = vmatpush.bf16.msra.mxu0 %v579
      %845 = vmatpush.bf16.msra.mxu0 %v563
      %846 = vmatmul.bf16.gmra.mxu0 %v703
      %v847 = vpop.f32.mrf.mxu0
      %v848 = vadd.f32 0.0, %v847
      %v849 = vpop.f32.mrf.mxu0
      %v850 = vadd.f32 0.0, %v849
      %851 = vdwg.mxu0
      %852 = vmatpush.bf16.msra.mxu0 0
      %853 = vmatpush.bf16.msra.mxu0 0
      %854 = vmatpush.bf16.msra.mxu0 0
      %855 = vmatpush.bf16.msra.mxu0 %v728
      %856 = vmatpush.bf16.msra.mxu0 %v612
      %857 = vmatpush.bf16.msra.mxu0 %v596
      %858 = vmatpush.bf16.msra.mxu0 %v580
      %859 = vmatpush.bf16.msra.mxu0 %v564
      %860 = vmatmul.bf16.gmra.mxu0 %v703
      %v861 = vpop.f32.mrf.mxu0
      %v862 = vadd.f32 0.0, %v861
      %v863 = vpop.f32.mrf.mxu0
      %v864 = vadd.f32 0.0, %v863
      %865 = vdwg.mxu0
      %866 = vmatpush.bf16.msra.mxu0 0
      %867 = vmatpush.bf16.msra.mxu0 0
      %868 = vmatpush.bf16.msra.mxu0 0
      %869 = vmatpush.bf16.msra.mxu0 %v731
      %870 = vmatpush.bf16.msra.mxu0 %v613
      %871 = vmatpush.bf16.msra.mxu0 %v597
      %872 = vmatpush.bf16.msra.mxu0 %v581
      %873 = vmatpush.bf16.msra.mxu0 %v565
      %874 = vmatmul.bf16.gmra.mxu0 %v703
      %v875 = vpop.f32.mrf.mxu0
      %v876 = vadd.f32 0.0, %v875
      %v877 = vpop.f32.mrf.mxu0
      %v878 = vadd.f32 0.0, %v877
      %879 = vdwg.mxu0
      %880 = vmatpush.bf16.msra.mxu0 0
      %881 = vmatpush.bf16.msra.mxu0 0
      %882 = vmatpush.bf16.msra.mxu0 0
      %883 = vmatpush.bf16.msra.mxu0 %v734
      %884 = vmatpush.bf16.msra.mxu0 %v614
      %885 = vmatpush.bf16.msra.mxu0 %v598
      %886 = vmatpush.bf16.msra.mxu0 %v582
      %887 = vmatpush.bf16.msra.mxu0 %v566
      %888 = vmatmul.bf16.gmra.mxu0 %v703
      %v889 = vpop.f32.mrf.mxu0
      %v890 = vadd.f32 0.0, %v889
      %v891 = vpop.f32.mrf.mxu0
      %v892 = vadd.f32 0.0, %v891
      %893 = vdwg.mxu0
      %894 = vmatpush.bf16.msra.mxu0 0
      %895 = vmatpush.bf16.msra.mxu0 0
      %896 = vmatpush.bf16.msra.mxu0 0
      %897 = vmatpush.bf16.msra.mxu0 %v737
      %898 = vmatpush.bf16.msra.mxu0 %v615
      %899 = vmatpush.bf16.msra.mxu0 %v599
      %900 = vmatpush.bf16.msra.mxu0 %v583
      %901 = vmatpush.bf16.msra.mxu0 %v567
      %902 = vmatmul.bf16.gmra.mxu0 %v703
      %v903 = vpop.f32.mrf.mxu0
      %v904 = vadd.f32 0.0, %v903
      %v905 = vpop.f32.mrf.mxu0
      %v906 = vadd.f32 0.0, %v905
      %907 = vdwg.mxu0
      %908 = vmatpush.bf16.msra.mxu0 0
      %909 = vmatpush.bf16.msra.mxu0 0
      %910 = vmatpush.bf16.msra.mxu0 0
      %911 = vmatpush.bf16.msra.mxu0 %v740
      %912 = vmatpush.bf16.msra.mxu0 %v616
      %913 = vmatpush.bf16.msra.mxu0 %v600
      %914 = vmatpush.bf16.msra.mxu0 %v584
      %915 = vmatpush.bf16.msra.mxu0 %v568
      %916 = vmatmul.bf16.gmra.mxu0 %v703
      %v917 = vpop.f32.mrf.mxu0
      %v918 = vadd.f32 0.0, %v917
      %v919 = vpop.f32.mrf.mxu0
      %v920 = vadd.f32 0.0, %v919
      %921 = vdwg.mxu0
      %922 = vmatpush.bf16.msra.mxu0 0
      %923 = vmatpush.bf16.msra.mxu0 0
      %924 = vmatpush.bf16.msra.mxu0 0
      %925 = vmatpush.bf16.msra.mxu0 %v743
      %926 = vmatpush.bf16.msra.mxu0 %v617
      %927 = vmatpush.bf16.msra.mxu0 %v601
      %928 = vmatpush.bf16.msra.mxu0 %v585
      %929 = vmatpush.bf16.msra.mxu0 %v569
      %930 = vmatmul.bf16.gmra.mxu0 %v703
      %v931 = vpop.f32.mrf.mxu0
      %v932 = vadd.f32 0.0, %v931
      %v933 = vpop.f32.mrf.mxu0
      %v934 = vadd.f32 0.0, %v933
      %935 = vdwg.mxu0
      %936 = vmatpush.bf16.msra.mxu0 0
      %937 = vmatpush.bf16.msra.mxu0 0
      %938 = vmatpush.bf16.msra.mxu0 0
      %939 = vmatpush.bf16.msra.mxu0 %v746
      %940 = vmatpush.bf16.msra.mxu0 %v618
      %941 = vmatpush.bf16.msra.mxu0 %v602
      %942 = vmatpush.bf16.msra.mxu0 %v586
      %943 = vmatpush.bf16.msra.mxu0 %v570
      %944 = vmatmul.bf16.gmra.mxu0 %v703
      %v945 = vpop.f32.mrf.mxu0
      %v946 = vadd.f32 0.0, %v945
      %v947 = vpop.f32.mrf.mxu0
      %v948 = vadd.f32 0.0, %v947
      %949 = vdwg.mxu0
      %950 = vmatpush.bf16.msra.mxu0 0
      %951 = vmatpush.bf16.msra.mxu0 0
      %952 = vmatpush.bf16.msra.mxu0 0
      %953 = vmatpush.bf16.msra.mxu0 %v749
      %954 = vmatpush.bf16.msra.mxu0 %v619
      %955 = vmatpush.bf16.msra.mxu0 %v603
      %956 = vmatpush.bf16.msra.mxu0 %v587
      %957 = vmatpush.bf16.msra.mxu0 %v571
      %958 = vmatmul.bf16.gmra.mxu0 %v703
      %v959 = vpop.f32.mrf.mxu0
      %v960 = vadd.f32 0.0, %v959
      %v961 = vpop.f32.mrf.mxu0
      %v962 = vadd.f32 0.0, %v961
      %963 = vdwg.mxu0
      %964 = vmatpush.bf16.msra.mxu0 0
      %965 = vmatpush.bf16.msra.mxu0 0
      %966 = vmatpush.bf16.msra.mxu0 0
      %967 = vmatpush.bf16.msra.mxu0 %v752
      %968 = vmatpush.bf16.msra.mxu0 %v620
      %969 = vmatpush.bf16.msra.mxu0 %v604
      %970 = vmatpush.bf16.msra.mxu0 %v588
      %971 = vmatpush.bf16.msra.mxu0 %v572
      %972 = vmatmul.bf16.gmra.mxu0 %v703
      %v973 = vpop.f32.mrf.mxu0
      %v974 = vadd.f32 0.0, %v973
      %v975 = vpop.f32.mrf.mxu0
      %v976 = vadd.f32 0.0, %v975
      %977 = vdwg.mxu0
      %v1050 = vunpack.c.l.b16 %v174
      %v1051 = vunpack.c.h.b16 %v174
      %v1052 = vunpack.c.l.b16 %v175
      %v1053 = vunpack.c.h.b16 %v175
      %v1054 = vunpack.c.l.b16 %v176
      %v1055 = vunpack.c.h.b16 %v176
      %v1056 = vunpack.c.l.b16 %v177
      %v1057 = vunpack.c.h.b16 %v177
      %v1058 = vunpack.c.l.b16 %v178
      %v1059 = vunpack.c.h.b16 %v178
      %v1060 = vunpack.c.l.b16 %v179
      %v1061 = vunpack.c.h.b16 %v179
      %v1062 = vunpack.c.l.b16 %v180
      %v1063 = vunpack.c.h.b16 %v180
      %v1064 = vunpack.c.l.b16 %v181
      %v1065 = vunpack.c.h.b16 %v181
      %v1066 = vunpack.c.l.b16 %v182
      %v1067 = vunpack.c.h.b16 %v182
      %v1068 = vunpack.c.l.b16 %v183
      %v1069 = vunpack.c.h.b16 %v183
      %v1070 = vunpack.c.l.b16 %v184
      %v1071 = vunpack.c.h.b16 %v184
      %v1072 = vunpack.c.l.b16 %v185
      %v1073 = vunpack.c.h.b16 %v185
      %v1074 = vunpack.c.l.b16 %v186
      %v1075 = vunpack.c.h.b16 %v186
      %v1076 = vunpack.c.l.b16 %v187
      %v1077 = vunpack.c.h.b16 %v187
      %v1078 = vunpack.c.l.b16 %v188
      %v1079 = vunpack.c.h.b16 %v188
      %v1080 = vunpack.c.l.b16 %v189
      %v1081 = vunpack.c.h.b16 %v189
      %v1082 = vunpack.c.l.b16 %v190
      %v1083 = vunpack.c.h.b16 %v190
      %v1084 = vunpack.c.l.b16 %v191
      %v1085 = vunpack.c.h.b16 %v191
      %v1086 = vunpack.c.l.b16 %v192
      %v1087 = vunpack.c.h.b16 %v192
      %v1088 = vunpack.c.l.b16 %v193
      %v1089 = vunpack.c.h.b16 %v193
      %v1090 = vunpack.c.l.b16 %v194
      %v1091 = vunpack.c.h.b16 %v194
      %v1092 = vunpack.c.l.b16 %v195
      %v1093 = vunpack.c.h.b16 %v195
      %v1094 = vunpack.c.l.b16 %v196
      %v1095 = vunpack.c.h.b16 %v196
      %v1096 = vunpack.c.l.b16 %v197
      %v1097 = vunpack.c.h.b16 %v197
      %v1098 = vunpack.c.l.b16 %v198
      %v1099 = vunpack.c.h.b16 %v198
      %v1100 = vunpack.c.l.b16 %v199
      %v1101 = vunpack.c.h.b16 %v199
      %v1102 = vunpack.c.l.b16 %v200
      %v1103 = vunpack.c.h.b16 %v200
      %v1104 = vunpack.c.l.b16 %v201
      %v1105 = vunpack.c.h.b16 %v201
      %v1106 = vunpack.c.l.b16 %v202
      %v1107 = vunpack.c.h.b16 %v202
      %v1108 = vunpack.c.l.b16 %v203
      %v1109 = vunpack.c.h.b16 %v203
      %v1110 = vunpack.c.l.b16 %v204
      %v1111 = vunpack.c.h.b16 %v204
      %v1112 = vunpack.c.l.b16 %v205
      %v1113 = vunpack.c.h.b16 %v205
      %v1114 = vunpack.c.l.b16 %v206
      %v1115 = vunpack.c.h.b16 %v206
      %v1116 = vunpack.c.l.b16 %v207
      %v1117 = vunpack.c.h.b16 %v207
      %v1118 = vunpack.c.l.b16 %v208
      %v1119 = vunpack.c.h.b16 %v208
      %v1120 = vunpack.c.l.b16 %v209
      %v1121 = vunpack.c.h.b16 %v209
      %v1122 = vunpack.c.l.b16 %v210
      %v1123 = vunpack.c.h.b16 %v210
      %v1124 = vunpack.c.l.b16 %v211
      %v1125 = vunpack.c.h.b16 %v211
      %v1126 = vunpack.c.l.b16 %v212
      %v1127 = vunpack.c.h.b16 %v212
      %v1128 = vunpack.c.l.b16 %v213
      %v1129 = vunpack.c.h.b16 %v213
      %v1130 = vunpack.c.l.b16 %v214
      %v1131 = vunpack.c.h.b16 %v214
      %v1132 = vunpack.c.l.b16 %v215
      %v1133 = vunpack.c.h.b16 %v215
      %v1134 = vunpack.c.l.b16 %v216
      %v1135 = vunpack.c.h.b16 %v216
      %v1136 = vunpack.c.l.b16 %v217
      %v1137 = vunpack.c.h.b16 %v217
      %v1138 = vunpack.c.l.b16 %v218
      %v1139 = vunpack.c.h.b16 %v218
      %v1140 = vunpack.c.l.b16 %v219
      %v1141 = vunpack.c.h.b16 %v219
      %v1142 = vunpack.c.l.b16 %v220
      %v1143 = vunpack.c.h.b16 %v220
      %v1144 = vunpack.c.l.b16 %v221
      %v1145 = vunpack.c.h.b16 %v221
      %v1146 = vunpack.c.l.b16 %v222
      %v1147 = vunpack.c.h.b16 %v222
      %v1148 = vunpack.c.l.b16 %v223
      %v1149 = vunpack.c.h.b16 %v223
      %v1150 = vunpack.c.l.b16 %v224
      %v1151 = vunpack.c.h.b16 %v224
      %v1152 = vunpack.c.l.b16 %v225
      %v1153 = vunpack.c.h.b16 %v225
      %v1154 = vunpack.c.l.b16 %v226
      %v1155 = vunpack.c.h.b16 %v226
      %v1156 = vunpack.c.l.b16 %v227
      %v1157 = vunpack.c.h.b16 %v227
      %v1158 = vunpack.c.l.b16 %v228
      %v1159 = vunpack.c.h.b16 %v228
      %v1160 = vunpack.c.l.b16 %v229
      %v1161 = vunpack.c.h.b16 %v229
      %v1162 = vunpack.c.l.b16 %v230
      %v1163 = vunpack.c.h.b16 %v230
      %v1164 = vunpack.c.l.b16 %v231
      %v1165 = vunpack.c.h.b16 %v231
      %v1166 = vunpack.c.l.b16 %v232
      %v1167 = vunpack.c.h.b16 %v232
      %v1168 = vunpack.c.l.b16 %v233
      %v1169 = vunpack.c.h.b16 %v233
      %v1170 = vunpack.c.l.b16 %v234
      %v1171 = vunpack.c.h.b16 %v234
      %v1172 = vunpack.c.l.b16 %v235
      %v1173 = vunpack.c.h.b16 %v235
      %v1174 = vunpack.c.l.b16 %v236
      %v1175 = vunpack.c.h.b16 %v236
      %v1176 = vunpack.c.l.b16 %v237
      %v1177 = vunpack.c.h.b16 %v237
      %v1178 = vunpack.c.l.b16 %v238
      %v1179 = vunpack.c.h.b16 %v238
      %v1180 = vunpack.c.l.b16 %v239
      %v1181 = vunpack.c.h.b16 %v239
      %v1182 = vunpack.c.l.b16 %v240
      %v1183 = vunpack.c.h.b16 %v240
      %v1184 = vunpack.c.l.b16 %v241
      %v1185 = vunpack.c.h.b16 %v241
      %v1186 = vunpack.c.l.b16 %v242
      %v1187 = vunpack.c.h.b16 %v242
      %v1188 = vunpack.c.l.b16 %v243
      %v1189 = vunpack.c.h.b16 %v243
      %v1190 = vunpack.c.l.b16 %v244
      %v1191 = vunpack.c.h.b16 %v244
      %v1192 = vunpack.c.l.b16 %v245
      %v1193 = vunpack.c.h.b16 %v245
      %v1194 = vpack.c.b16 %v1066, %v1050
      %v1195 = vpack.c.b16 %v1067, %v1051
      %v1196 = vpack.c.b16 %v1068, %v1052
      %v1197 = vpack.c.b16 %v1069, %v1053
      %v1198 = vpack.c.b16 %v1070, %v1054
      %v1199 = vpack.c.b16 %v1071, %v1055
      %v1200 = vpack.c.b16 %v1072, %v1056
      %v1201 = vpack.c.b16 %v1073, %v1057
      %v1202 = vpack.c.b16 %v1074, %v1058
      %v1203 = vpack.c.b16 %v1075, %v1059
      %v1204 = vpack.c.b16 %v1076, %v1060
      %v1205 = vpack.c.b16 %v1077, %v1061
      %v1206 = vpack.c.b16 %v1078, %v1062
      %v1207 = vpack.c.b16 %v1079, %v1063
      %v1208 = vpack.c.b16 %v1080, %v1064
      %v1209 = vpack.c.b16 %v1081, %v1065
      %v1210 = vpack.c.b16 %v1098, %v1082
      %v1211 = vpack.c.b16 %v1099, %v1083
      %v1212 = vpack.c.b16 %v1100, %v1084
      %v1213 = vpack.c.b16 %v1101, %v1085
      %v1214 = vpack.c.b16 %v1102, %v1086
      %v1215 = vpack.c.b16 %v1103, %v1087
      %v1216 = vpack.c.b16 %v1104, %v1088
      %v1217 = vpack.c.b16 %v1105, %v1089
      %v1218 = vpack.c.b16 %v1106, %v1090
      %v1219 = vpack.c.b16 %v1107, %v1091
      %v1220 = vpack.c.b16 %v1108, %v1092
      %v1221 = vpack.c.b16 %v1109, %v1093
      %v1222 = vpack.c.b16 %v1110, %v1094
      %v1223 = vpack.c.b16 %v1111, %v1095
      %v1224 = vpack.c.b16 %v1112, %v1096
      %v1225 = vpack.c.b16 %v1113, %v1097
      %v1226 = vpack.c.b16 %v1130, %v1114
      %v1227 = vpack.c.b16 %v1131, %v1115
      %v1228 = vpack.c.b16 %v1132, %v1116
      %v1229 = vpack.c.b16 %v1133, %v1117
      %v1230 = vpack.c.b16 %v1134, %v1118
      %v1231 = vpack.c.b16 %v1135, %v1119
      %v1232 = vpack.c.b16 %v1136, %v1120
      %v1233 = vpack.c.b16 %v1137, %v1121
      %v1234 = vpack.c.b16 %v1138, %v1122
      %v1235 = vpack.c.b16 %v1139, %v1123
      %v1236 = vpack.c.b16 %v1140, %v1124
      %v1237 = vpack.c.b16 %v1141, %v1125
      %v1238 = vpack.c.b16 %v1142, %v1126
      %v1239 = vpack.c.b16 %v1143, %v1127
      %v1240 = vpack.c.b16 %v1144, %v1128
      %v1241 = vpack.c.b16 %v1145, %v1129
      %v1242 = vpack.c.b16 %v1162, %v1146
      %v1243 = vpack.c.b16 %v1163, %v1147
      %v1244 = vpack.c.b16 %v1164, %v1148
      %v1245 = vpack.c.b16 %v1165, %v1149
      %v1246 = vpack.c.b16 %v1166, %v1150
      %v1247 = vpack.c.b16 %v1167, %v1151
      %v1248 = vpack.c.b16 %v1168, %v1152
      %v1249 = vpack.c.b16 %v1169, %v1153
      %v1250 = vpack.c.b16 %v1170, %v1154
      %v1251 = vpack.c.b16 %v1171, %v1155
      %v1252 = vpack.c.b16 %v1172, %v1156
      %v1253 = vpack.c.b16 %v1173, %v1157
      %v1254 = vpack.c.b16 %v1174, %v1158
      %v1255 = vpack.c.b16 %v1175, %v1159
      %v1256 = vpack.c.b16 %v1176, %v1160
      %v1257 = vpack.c.b16 %v1177, %v1161
      %v1258 = vpack.c.b16 %v1178, %v1178
      %v1259 = vpack.c.b16 %v1179, %v1179
      %v1260 = vpack.c.b16 %v1180, %v1180
      %v1261 = vpack.c.b16 %v1181, %v1181
      %v1262 = vpack.c.b16 %v1182, %v1182
      %v1263 = vpack.c.b16 %v1183, %v1183
      %v1264 = vpack.c.b16 %v1184, %v1184
      %v1265 = vpack.c.b16 %v1185, %v1185
      %v1266 = vpack.c.b16 %v1186, %v1186
      %v1267 = vpack.c.b16 %v1187, %v1187
      %v1268 = vpack.c.b16 %v1188, %v1188
      %v1269 = vpack.c.b16 %v1189, %v1189
      %v1270 = vpack.c.b16 %v1190, %v1190
      %v1271 = vpack.c.b16 %v1191, %v1191
      %v1272 = vpack.c.b16 %v1192, %v1192
      %v1273 = vpack.c.b16 %v1193, %v1193
      %v1338 = vsel %vm701, %v326, 0
      %v1341 = vsel %vm705, %v1258, 0
      %v1344 = vsel %vm705, %v1259, 0
      %v1347 = vsel %vm705, %v1260, 0
      %v1350 = vsel %vm705, %v1261, 0
      %v1353 = vsel %vm705, %v1262, 0
      %v1356 = vsel %vm705, %v1263, 0
      %v1359 = vsel %vm705, %v1264, 0
      %v1362 = vsel %vm705, %v1265, 0
      %v1365 = vsel %vm705, %v1266, 0
      %v1368 = vsel %vm705, %v1267, 0
      %v1371 = vsel %vm705, %v1268, 0
      %v1374 = vsel %vm705, %v1269, 0
      %v1377 = vsel %vm705, %v1270, 0
      %v1380 = vsel %vm705, %v1271, 0
      %v1383 = vsel %vm705, %v1272, 0
      %v1386 = vsel %vm705, %v1273, 0
      %1388 = vmatpush.bf16.msra.mxu0 0
      %1389 = vmatpush.bf16.msra.mxu0 0
      %1390 = vmatpush.bf16.msra.mxu0 0
      %1391 = vmatpush.bf16.msra.mxu0 %v1341
      %1392 = vmatpush.bf16.msra.mxu0 %v1242
      %1393 = vmatpush.bf16.msra.mxu0 %v1226
      %1394 = vmatpush.bf16.msra.mxu0 %v1210
      %1395 = vmatpush.bf16.msra.mxu0 %v1194
      %1396 = vmatmul.bf16.gmra.mxu0 %v1338
      %v1397 = vpop.f32.mrf.mxu0
      %v1398 = vadd.f32 %v764, %v1397
      %v1399 = vpop.f32.mrf.mxu0
      %v1400 = vadd.f32 %v766, %v1399
      %1401 = vdwg.mxu0
      %1402 = vmatpush.bf16.msra.mxu0 0
      %1403 = vmatpush.bf16.msra.mxu0 0
      %1404 = vmatpush.bf16.msra.mxu0 0
      %1405 = vmatpush.bf16.msra.mxu0 %v1344
      %1406 = vmatpush.bf16.msra.mxu0 %v1243
      %1407 = vmatpush.bf16.msra.mxu0 %v1227
      %1408 = vmatpush.bf16.msra.mxu0 %v1211
      %1409 = vmatpush.bf16.msra.mxu0 %v1195
      %1410 = vmatmul.bf16.gmra.mxu0 %v1338
      %v1411 = vpop.f32.mrf.mxu0
      %v1412 = vadd.f32 %v778, %v1411
      %v1413 = vpop.f32.mrf.mxu0
      %v1414 = vadd.f32 %v780, %v1413
      %1415 = vdwg.mxu0
      %1416 = vmatpush.bf16.msra.mxu0 0
      %1417 = vmatpush.bf16.msra.mxu0 0
      %1418 = vmatpush.bf16.msra.mxu0 0
      %1419 = vmatpush.bf16.msra.mxu0 %v1347
      %1420 = vmatpush.bf16.msra.mxu0 %v1244
      %1421 = vmatpush.bf16.msra.mxu0 %v1228
      %1422 = vmatpush.bf16.msra.mxu0 %v1212
      %1423 = vmatpush.bf16.msra.mxu0 %v1196
      %1424 = vmatmul.bf16.gmra.mxu0 %v1338
      %v1425 = vpop.f32.mrf.mxu0
      %v1426 = vadd.f32 %v792, %v1425
      %v1427 = vpop.f32.mrf.mxu0
      %v1428 = vadd.f32 %v794, %v1427
      %1429 = vdwg.mxu0
      %1430 = vmatpush.bf16.msra.mxu0 0
      %1431 = vmatpush.bf16.msra.mxu0 0
      %1432 = vmatpush.bf16.msra.mxu0 0
      %1433 = vmatpush.bf16.msra.mxu0 %v1350
      %1434 = vmatpush.bf16.msra.mxu0 %v1245
      %1435 = vmatpush.bf16.msra.mxu0 %v1229
      %1436 = vmatpush.bf16.msra.mxu0 %v1213
      %1437 = vmatpush.bf16.msra.mxu0 %v1197
      %1438 = vmatmul.bf16.gmra.mxu0 %v1338
      %v1439 = vpop.f32.mrf.mxu0
      %v1440 = vadd.f32 %v806, %v1439
      %v1441 = vpop.f32.mrf.mxu0
      %v1442 = vadd.f32 %v808, %v1441
      %1443 = vdwg.mxu0
      %1444 = vmatpush.bf16.msra.mxu0 0
      %1445 = vmatpush.bf16.msra.mxu0 0
      %1446 = vmatpush.bf16.msra.mxu0 0
      %1447 = vmatpush.bf16.msra.mxu0 %v1353
      %1448 = vmatpush.bf16.msra.mxu0 %v1246
      %1449 = vmatpush.bf16.msra.mxu0 %v1230
      %1450 = vmatpush.bf16.msra.mxu0 %v1214
      %1451 = vmatpush.bf16.msra.mxu0 %v1198
      %1452 = vmatmul.bf16.gmra.mxu0 %v1338
      %v1453 = vpop.f32.mrf.mxu0
      %v1454 = vadd.f32 %v820, %v1453
      %v1455 = vpop.f32.mrf.mxu0
      %v1456 = vadd.f32 %v822, %v1455
      %1457 = vdwg.mxu0
      %1458 = vmatpush.bf16.msra.mxu0 0
      %1459 = vmatpush.bf16.msra.mxu0 0
      %1460 = vmatpush.bf16.msra.mxu0 0
      %1461 = vmatpush.bf16.msra.mxu0 %v1356
      %1462 = vmatpush.bf16.msra.mxu0 %v1247
      %1463 = vmatpush.bf16.msra.mxu0 %v1231
      %1464 = vmatpush.bf16.msra.mxu0 %v1215
      %1465 = vmatpush.bf16.msra.mxu0 %v1199
      %1466 = vmatmul.bf16.gmra.mxu0 %v1338
      %v1467 = vpop.f32.mrf.mxu0
      %v1468 = vadd.f32 %v834, %v1467
      %v1469 = vpop.f32.mrf.mxu0
      %v1470 = vadd.f32 %v836, %v1469
      %1471 = vdwg.mxu0
      %1472 = vmatpush.bf16.msra.mxu0 0
      %1473 = vmatpush.bf16.msra.mxu0 0
      %1474 = vmatpush.bf16.msra.mxu0 0
      %1475 = vmatpush.bf16.msra.mxu0 %v1359
      %1476 = vmatpush.bf16.msra.mxu0 %v1248
      %1477 = vmatpush.bf16.msra.mxu0 %v1232
      %1478 = vmatpush.bf16.msra.mxu0 %v1216
      %1479 = vmatpush.bf16.msra.mxu0 %v1200
      %1480 = vmatmul.bf16.gmra.mxu0 %v1338
      %v1481 = vpop.f32.mrf.mxu0
      %v1482 = vadd.f32 %v848, %v1481
      %v1483 = vpop.f32.mrf.mxu0
      %v1484 = vadd.f32 %v850, %v1483
      %1485 = vdwg.mxu0
      %1486 = vmatpush.bf16.msra.mxu0 0
      %1487 = vmatpush.bf16.msra.mxu0 0
      %1488 = vmatpush.bf16.msra.mxu0 0
      %1489 = vmatpush.bf16.msra.mxu0 %v1362
      %1490 = vmatpush.bf16.msra.mxu0 %v1249
      %1491 = vmatpush.bf16.msra.mxu0 %v1233
      %1492 = vmatpush.bf16.msra.mxu0 %v1217
      %1493 = vmatpush.bf16.msra.mxu0 %v1201
      %1494 = vmatmul.bf16.gmra.mxu0 %v1338
      %v1495 = vpop.f32.mrf.mxu0
      %v1496 = vadd.f32 %v862, %v1495
      %v1497 = vpop.f32.mrf.mxu0
      %v1498 = vadd.f32 %v864, %v1497
      %1499 = vdwg.mxu0
      %1500 = vmatpush.bf16.msra.mxu0 0
      %1501 = vmatpush.bf16.msra.mxu0 0
      %1502 = vmatpush.bf16.msra.mxu0 0
      %1503 = vmatpush.bf16.msra.mxu0 %v1365
      %1504 = vmatpush.bf16.msra.mxu0 %v1250
      %1505 = vmatpush.bf16.msra.mxu0 %v1234
      %1506 = vmatpush.bf16.msra.mxu0 %v1218
      %1507 = vmatpush.bf16.msra.mxu0 %v1202
      %1508 = vmatmul.bf16.gmra.mxu0 %v1338
      %v1509 = vpop.f32.mrf.mxu0
      %v1510 = vadd.f32 %v876, %v1509
      %v1511 = vpop.f32.mrf.mxu0
      %v1512 = vadd.f32 %v878, %v1511
      %1513 = vdwg.mxu0
      %1514 = vmatpush.bf16.msra.mxu0 0
      %1515 = vmatpush.bf16.msra.mxu0 0
      %1516 = vmatpush.bf16.msra.mxu0 0
      %1517 = vmatpush.bf16.msra.mxu0 %v1368
      %1518 = vmatpush.bf16.msra.mxu0 %v1251
      %1519 = vmatpush.bf16.msra.mxu0 %v1235
      %1520 = vmatpush.bf16.msra.mxu0 %v1219
      %1521 = vmatpush.bf16.msra.mxu0 %v1203
      %1522 = vmatmul.bf16.gmra.mxu0 %v1338
      %v1523 = vpop.f32.mrf.mxu0
      %v1524 = vadd.f32 %v890, %v1523
      %v1525 = vpop.f32.mrf.mxu0
      %v1526 = vadd.f32 %v892, %v1525
      %1527 = vdwg.mxu0
      %1528 = vmatpush.bf16.msra.mxu0 0
      %1529 = vmatpush.bf16.msra.mxu0 0
      %1530 = vmatpush.bf16.msra.mxu0 0
      %1531 = vmatpush.bf16.msra.mxu0 %v1371
      %1532 = vmatpush.bf16.msra.mxu0 %v1252
      %1533 = vmatpush.bf16.msra.mxu0 %v1236
      %1534 = vmatpush.bf16.msra.mxu0 %v1220
      %1535 = vmatpush.bf16.msra.mxu0 %v1204
      %1536 = vmatmul.bf16.gmra.mxu0 %v1338
      %v1537 = vpop.f32.mrf.mxu0
      %v1538 = vadd.f32 %v904, %v1537
      %v1539 = vpop.f32.mrf.mxu0
      %v1540 = vadd.f32 %v906, %v1539
      %1541 = vdwg.mxu0
      %1542 = vmatpush.bf16.msra.mxu0 0
      %1543 = vmatpush.bf16.msra.mxu0 0
      %1544 = vmatpush.bf16.msra.mxu0 0
      %1545 = vmatpush.bf16.msra.mxu0 %v1374
      %1546 = vmatpush.bf16.msra.mxu0 %v1253
      %1547 = vmatpush.bf16.msra.mxu0 %v1237
      %1548 = vmatpush.bf16.msra.mxu0 %v1221
      %1549 = vmatpush.bf16.msra.mxu0 %v1205
      %1550 = vmatmul.bf16.gmra.mxu0 %v1338
      %v1551 = vpop.f32.mrf.mxu0
      %v1552 = vadd.f32 %v918, %v1551
      %v1553 = vpop.f32.mrf.mxu0
      %v1554 = vadd.f32 %v920, %v1553
      %1555 = vdwg.mxu0
      %1556 = vmatpush.bf16.msra.mxu0 0
      %1557 = vmatpush.bf16.msra.mxu0 0
      %1558 = vmatpush.bf16.msra.mxu0 0
      %1559 = vmatpush.bf16.msra.mxu0 %v1377
      %1560 = vmatpush.bf16.msra.mxu0 %v1254
      %1561 = vmatpush.bf16.msra.mxu0 %v1238
      %1562 = vmatpush.bf16.msra.mxu0 %v1222
      %1563 = vmatpush.bf16.msra.mxu0 %v1206
      %1564 = vmatmul.bf16.gmra.mxu0 %v1338
      %v1565 = vpop.f32.mrf.mxu0
      %v1566 = vadd.f32 %v932, %v1565
      %v1567 = vpop.f32.mrf.mxu0
      %v1568 = vadd.f32 %v934, %v1567
      %1569 = vdwg.mxu0
      %1570 = vmatpush.bf16.msra.mxu0 0
      %1571 = vmatpush.bf16.msra.mxu0 0
      %1572 = vmatpush.bf16.msra.mxu0 0
      %1573 = vmatpush.bf16.msra.mxu0 %v1380
      %1574 = vmatpush.bf16.msra.mxu0 %v1255
      %1575 = vmatpush.bf16.msra.mxu0 %v1239
      %1576 = vmatpush.bf16.msra.mxu0 %v1223
      %1577 = vmatpush.bf16.msra.mxu0 %v1207
      %1578 = vmatmul.bf16.gmra.mxu0 %v1338
      %v1579 = vpop.f32.mrf.mxu0
      %v1580 = vadd.f32 %v946, %v1579
      %v1581 = vpop.f32.mrf.mxu0
      %v1582 = vadd.f32 %v948, %v1581
      %1583 = vdwg.mxu0
      %1584 = vmatpush.bf16.msra.mxu0 0
      %1585 = vmatpush.bf16.msra.mxu0 0
      %1586 = vmatpush.bf16.msra.mxu0 0
      %1587 = vmatpush.bf16.msra.mxu0 %v1383
      %1588 = vmatpush.bf16.msra.mxu0 %v1256
      %1589 = vmatpush.bf16.msra.mxu0 %v1240
      %1590 = vmatpush.bf16.msra.mxu0 %v1224
      %1591 = vmatpush.bf16.msra.mxu0 %v1208
      %1592 = vmatmul.bf16.gmra.mxu0 %v1338
      %v1593 = vpop.f32.mrf.mxu0
      %v1594 = vadd.f32 %v960, %v1593
      %v1595 = vpop.f32.mrf.mxu0
      %v1596 = vadd.f32 %v962, %v1595
      %1597 = vdwg.mxu0
      %1598 = vmatpush.bf16.msra.mxu0 0
      %1599 = vmatpush.bf16.msra.mxu0 0
      %1600 = vmatpush.bf16.msra.mxu0 0
      %1601 = vmatpush.bf16.msra.mxu0 %v1386
      %1602 = vmatpush.bf16.msra.mxu0 %v1257
      %1603 = vmatpush.bf16.msra.mxu0 %v1241
      %1604 = vmatpush.bf16.msra.mxu0 %v1225
      %1605 = vmatpush.bf16.msra.mxu0 %v1209
      %1606 = vmatmul.bf16.gmra.mxu0 %v1338
      %v1607 = vpop.f32.mrf.mxu0
      %v1608 = vadd.f32 %v974, %v1607
      %v1609 = vpop.f32.mrf.mxu0
      %v1610 = vadd.f32 %v976, %v1609
      %1611 = vdwg.mxu0
      %v1612 = vld [vmem:[%s165] sm:$0xe]
      %s1613 = scalar_lea.vmem %s1, 1152
      %v1614 = vld [vmem:[%s1613] sm:$0xff]
      %v1615 = vld [vmem:[%s1613 + $0x8] sm:$0xff]
      %v1616 = vld [vmem:[%s1613 + $0x10] sm:$0xff]
      %v1617 = vld [vmem:[%s1613 + $0x18] sm:$0xff]
      %v1618 = vld [vmem:[%s1613 + $0x20] sm:$0xff]
      %v1619 = vld [vmem:[%s1613 + $0x28] sm:$0xff]
      %v1620 = vld [vmem:[%s1613 + $0x30] sm:$0xff]
      %v1621 = vld [vmem:[%s1613 + $0x38] sm:$0xff]
      %v1622 = vld [vmem:[%s1613 + $0x40] sm:$0xff]
      %v1623 = vld [vmem:[%s1613 + $0x48] sm:$0xff]
      %v1624 = vld [vmem:[%s1613 + $0x50] sm:$0xff]
      %v1625 = vld [vmem:[%s1613 + $0x58] sm:$0xff]
      %v1626 = vld [vmem:[%s1613 + $0x60] sm:$0xff]
      %v1627 = vld [vmem:[%s1613 + $0x68] sm:$0xff]
      %v1628 = vld [vmem:[%s1613 + $0x70] sm:$0xff]
      %v1629 = vld [vmem:[%s1613 + $0x78] sm:$0xff]
      %v1630 = vld [vmem:[%s1613 + $0x80] sm:$0xff]
      %v1631 = vld [vmem:[%s1613 + $0x88] sm:$0xff]
      %v1632 = vld [vmem:[%s1613 + $0x90] sm:$0xff]
      %v1633 = vld [vmem:[%s1613 + $0x98] sm:$0xff]
      %v1634 = vld [vmem:[%s1613 + $0xa0] sm:$0xff]
      %v1635 = vld [vmem:[%s1613 + $0xa8] sm:$0xff]
      %v1636 = vld [vmem:[%s1613 + $0xb0] sm:$0xff]
      %v1637 = vld [vmem:[%s1613 + $0xb8] sm:$0xff]
      %v1638 = vld [vmem:[%s1613 + $0xc0] sm:$0xff]
      %v1639 = vld [vmem:[%s1613 + $0xc8] sm:$0xff]
      %v1640 = vld [vmem:[%s1613 + $0xd0] sm:$0xff]
      %v1641 = vld [vmem:[%s1613 + $0xd8] sm:$0xff]
      %v1642 = vld [vmem:[%s1613 + $0xe0] sm:$0xff]
      %v1643 = vld [vmem:[%s1613 + $0xe8] sm:$0xff]
      %v1644 = vld [vmem:[%s1613 + $0xf0] sm:$0xff]
      %v1645 = vld [vmem:[%s1613 + $0xf8] sm:$0xff]
      %v1646 = vld [vmem:[%s1613 + $0x100] sm:$0xff]
      %v1647 = vld [vmem:[%s1613 + $0x108] sm:$0xff]
      %v1648 = vld [vmem:[%s1613 + $0x110] sm:$0xff]
      %v1649 = vld [vmem:[%s1613 + $0x118] sm:$0xff]
      %v1650 = vld [vmem:[%s1613 + $0x120] sm:$0xff]
      %v1651 = vld [vmem:[%s1613 + $0x128] sm:$0xff]
      %v1652 = vld [vmem:[%s1613 + $0x130] sm:$0xff]
      %v1653 = vld [vmem:[%s1613 + $0x138] sm:$0xff]
      %v1654 = vld [vmem:[%s1613 + $0x140] sm:$0xff]
      %v1655 = vld [vmem:[%s1613 + $0x148] sm:$0xff]
      %v1656 = vld [vmem:[%s1613 + $0x150] sm:$0xff]
      %v1657 = vld [vmem:[%s1613 + $0x158] sm:$0xff]
      %v1658 = vld [vmem:[%s1613 + $0x160] sm:$0xff]
      %v1659 = vld [vmem:[%s1613 + $0x168] sm:$0xff]
      %v1660 = vld [vmem:[%s1613 + $0x170] sm:$0xff]
      %v1661 = vld [vmem:[%s1613 + $0x178] sm:$0xff]
      %v1662 = vld [vmem:[%s1613 + $0x180] sm:$0xff]
      %v1663 = vld [vmem:[%s1613 + $0x188] sm:$0xff]
      %v1664 = vld [vmem:[%s1613 + $0x190] sm:$0xff]
      %v1665 = vld [vmem:[%s1613 + $0x198] sm:$0xff]
      %v1666 = vld [vmem:[%s1613 + $0x1a0] sm:$0xff]
      %v1667 = vld [vmem:[%s1613 + $0x1a8] sm:$0xff]
      %v1668 = vld [vmem:[%s1613 + $0x1b0] sm:$0xff]
      %v1669 = vld [vmem:[%s1613 + $0x1b8] sm:$0xff]
      %v1670 = vld [vmem:[%s1613 + $0x1c0] sm:$0xff]
      %v1671 = vld [vmem:[%s1613 + $0x1c8] sm:$0xff]
      %v1672 = vld [vmem:[%s1613 + $0x1d0] sm:$0xff]
      %v1673 = vld [vmem:[%s1613 + $0x1d8] sm:$0xff]
      %v1674 = vld [vmem:[%s1613 + $0x1e0] sm:$0xff]
      %v1675 = vld [vmem:[%s1613 + $0x1e8] sm:$0xff]
      %v1676 = vld [vmem:[%s1613 + $0x1f0] sm:$0xff]
      %v1677 = vld [vmem:[%s1613 + $0x1f8] sm:$0xff]
      %v1678 = vld [vmem:[%s1613 + $0x200] sm:$0xff]
      %v1679 = vld [vmem:[%s1613 + $0x208] sm:$0xff]
      %v1680 = vld [vmem:[%s1613 + $0x210] sm:$0xff]
      %v1681 = vld [vmem:[%s1613 + $0x218] sm:$0xff]
      %v1682 = vld [vmem:[%s1613 + $0x220] sm:$0xff]
      %v1683 = vld [vmem:[%s1613 + $0x228] sm:$0xff]
      %v1684 = vld [vmem:[%s1613 + $0x230] sm:$0xff]
      %v1685 = vld [vmem:[%s1613 + $0x238] sm:$0xff]
      %v1687 = vunpack.c.l.b16 %v1612
      %v1688 = vpack.c.b16 %v324, %v1687
      %vm1689 = vcmask 1046528
      %v1690 = vrot.slane %v1688, 1
      %v1691 = vrot.slane %v327, 1
      %v1692 = vsel %vm1689, %v1690, %v1691
      %v1765 = vunpack.c.l.b16 %v1614
      %v1766 = vunpack.c.h.b16 %v1614
      %v1767 = vunpack.c.l.b16 %v1615
      %v1768 = vunpack.c.h.b16 %v1615
      %v1769 = vunpack.c.l.b16 %v1616
      %v1770 = vunpack.c.h.b16 %v1616
      %v1771 = vunpack.c.l.b16 %v1617
      %v1772 = vunpack.c.h.b16 %v1617
      %v1773 = vunpack.c.l.b16 %v1618
      %v1774 = vunpack.c.h.b16 %v1618
      %v1775 = vunpack.c.l.b16 %v1619
      %v1776 = vunpack.c.h.b16 %v1619
      %v1777 = vunpack.c.l.b16 %v1620
      %v1778 = vunpack.c.h.b16 %v1620
      %v1779 = vunpack.c.l.b16 %v1621
      %v1780 = vunpack.c.h.b16 %v1621
      %v1781 = vunpack.c.l.b16 %v1622
      %v1782 = vunpack.c.h.b16 %v1622
      %v1783 = vunpack.c.l.b16 %v1623
      %v1784 = vunpack.c.h.b16 %v1623
      %v1785 = vunpack.c.l.b16 %v1624
      %v1786 = vunpack.c.h.b16 %v1624
      %v1787 = vunpack.c.l.b16 %v1625
      %v1788 = vunpack.c.h.b16 %v1625
      %v1789 = vunpack.c.l.b16 %v1626
      %v1790 = vunpack.c.h.b16 %v1626
      %v1791 = vunpack.c.l.b16 %v1627
      %v1792 = vunpack.c.h.b16 %v1627
      %v1793 = vunpack.c.l.b16 %v1628
      %v1794 = vunpack.c.h.b16 %v1628
      %v1795 = vunpack.c.l.b16 %v1629
      %v1796 = vunpack.c.h.b16 %v1629
      %v1797 = vunpack.c.l.b16 %v1630
      %v1798 = vunpack.c.h.b16 %v1630
      %v1799 = vunpack.c.l.b16 %v1631
      %v1800 = vunpack.c.h.b16 %v1631
      %v1801 = vunpack.c.l.b16 %v1632
      %v1802 = vunpack.c.h.b16 %v1632
      %v1803 = vunpack.c.l.b16 %v1633
      %v1804 = vunpack.c.h.b16 %v1633
      %v1805 = vunpack.c.l.b16 %v1634
      %v1806 = vunpack.c.h.b16 %v1634
      %v1807 = vunpack.c.l.b16 %v1635
      %v1808 = vunpack.c.h.b16 %v1635
      %v1809 = vunpack.c.l.b16 %v1636
      %v1810 = vunpack.c.h.b16 %v1636
      %v1811 = vunpack.c.l.b16 %v1637
      %v1812 = vunpack.c.h.b16 %v1637
      %v1813 = vunpack.c.l.b16 %v1638
      %v1814 = vunpack.c.h.b16 %v1638
      %v1815 = vunpack.c.l.b16 %v1639
      %v1816 = vunpack.c.h.b16 %v1639
      %v1817 = vunpack.c.l.b16 %v1640
      %v1818 = vunpack.c.h.b16 %v1640
      %v1819 = vunpack.c.l.b16 %v1641
      %v1820 = vunpack.c.h.b16 %v1641
      %v1821 = vunpack.c.l.b16 %v1642
      %v1822 = vunpack.c.h.b16 %v1642
      %v1823 = vunpack.c.l.b16 %v1643
      %v1824 = vunpack.c.h.b16 %v1643
      %v1825 = vunpack.c.l.b16 %v1644
      %v1826 = vunpack.c.h.b16 %v1644
      %v1827 = vunpack.c.l.b16 %v1645
      %v1828 = vunpack.c.h.b16 %v1645
      %v1829 = vunpack.c.l.b16 %v1646
      %v1830 = vunpack.c.h.b16 %v1646
      %v1831 = vunpack.c.l.b16 %v1647
      %v1832 = vunpack.c.h.b16 %v1647
      %v1833 = vunpack.c.l.b16 %v1648
      %v1834 = vunpack.c.h.b16 %v1648
      %v1835 = vunpack.c.l.b16 %v1649
      %v1836 = vunpack.c.h.b16 %v1649
      %v1837 = vunpack.c.l.b16 %v1650
      %v1838 = vunpack.c.h.b16 %v1650
      %v1839 = vunpack.c.l.b16 %v1651
      %v1840 = vunpack.c.h.b16 %v1651
      %v1841 = vunpack.c.l.b16 %v1652
      %v1842 = vunpack.c.h.b16 %v1652
      %v1843 = vunpack.c.l.b16 %v1653
      %v1844 = vunpack.c.h.b16 %v1653
      %v1845 = vunpack.c.l.b16 %v1654
      %v1846 = vunpack.c.h.b16 %v1654
      %v1847 = vunpack.c.l.b16 %v1655
      %v1848 = vunpack.c.h.b16 %v1655
      %v1849 = vunpack.c.l.b16 %v1656
      %v1850 = vunpack.c.h.b16 %v1656
      %v1851 = vunpack.c.l.b16 %v1657
      %v1852 = vunpack.c.h.b16 %v1657
      %v1853 = vunpack.c.l.b16 %v1658
      %v1854 = vunpack.c.h.b16 %v1658
      %v1855 = vunpack.c.l.b16 %v1659
      %v1856 = vunpack.c.h.b16 %v1659
      %v1857 = vunpack.c.l.b16 %v1660
      %v1858 = vunpack.c.h.b16 %v1660
      %v1859 = vunpack.c.l.b16 %v1661
      %v1860 = vunpack.c.h.b16 %v1661
      %v1861 = vunpack.c.l.b16 %v1662
      %v1862 = vunpack.c.h.b16 %v1662
      %v1863 = vunpack.c.l.b16 %v1663
      %v1864 = vunpack.c.h.b16 %v1663
      %v1865 = vunpack.c.l.b16 %v1664
      %v1866 = vunpack.c.h.b16 %v1664
      %v1867 = vunpack.c.l.b16 %v1665
      %v1868 = vunpack.c.h.b16 %v1665
      %v1869 = vunpack.c.l.b16 %v1666
      %v1870 = vunpack.c.h.b16 %v1666
      %v1871 = vunpack.c.l.b16 %v1667
      %v1872 = vunpack.c.h.b16 %v1667
      %v1873 = vunpack.c.l.b16 %v1668
      %v1874 = vunpack.c.h.b16 %v1668
      %v1875 = vunpack.c.l.b16 %v1669
      %v1876 = vunpack.c.h.b16 %v1669
      %v1877 = vunpack.c.l.b16 %v1670
      %v1878 = vunpack.c.h.b16 %v1670
      %v1879 = vunpack.c.l.b16 %v1671
      %v1880 = vunpack.c.h.b16 %v1671
      %v1881 = vunpack.c.l.b16 %v1672
      %v1882 = vunpack.c.h.b16 %v1672
      %v1883 = vunpack.c.l.b16 %v1673
      %v1884 = vunpack.c.h.b16 %v1673
      %v1885 = vunpack.c.l.b16 %v1674
      %v1886 = vunpack.c.h.b16 %v1674
      %v1887 = vunpack.c.l.b16 %v1675
      %v1888 = vunpack.c.h.b16 %v1675
      %v1889 = vunpack.c.l.b16 %v1676
      %v1890 = vunpack.c.h.b16 %v1676
      %v1891 = vunpack.c.l.b16 %v1677
      %v1892 = vunpack.c.h.b16 %v1677
      %v1893 = vunpack.c.l.b16 %v1678
      %v1894 = vunpack.c.h.b16 %v1678
      %v1895 = vunpack.c.l.b16 %v1679
      %v1896 = vunpack.c.h.b16 %v1679
      %v1897 = vunpack.c.l.b16 %v1680
      %v1898 = vunpack.c.h.b16 %v1680
      %v1899 = vunpack.c.l.b16 %v1681
      %v1900 = vunpack.c.h.b16 %v1681
      %v1901 = vunpack.c.l.b16 %v1682
      %v1902 = vunpack.c.h.b16 %v1682
      %v1903 = vunpack.c.l.b16 %v1683
      %v1904 = vunpack.c.h.b16 %v1683
      %v1905 = vunpack.c.l.b16 %v1684
      %v1906 = vunpack.c.h.b16 %v1684
      %v1907 = vunpack.c.l.b16 %v1685
      %v1908 = vunpack.c.h.b16 %v1685
      %v1909 = vpack.c.b16 %v1781, %v1765
      %v1910 = vpack.c.b16 %v1782, %v1766
      %v1911 = vpack.c.b16 %v1783, %v1767
      %v1912 = vpack.c.b16 %v1784, %v1768
      %v1913 = vpack.c.b16 %v1785, %v1769
      %v1914 = vpack.c.b16 %v1786, %v1770
      %v1915 = vpack.c.b16 %v1787, %v1771
      %v1916 = vpack.c.b16 %v1788, %v1772
      %v1917 = vpack.c.b16 %v1789, %v1773
      %v1918 = vpack.c.b16 %v1790, %v1774
      %v1919 = vpack.c.b16 %v1791, %v1775
      %v1920 = vpack.c.b16 %v1792, %v1776
      %v1921 = vpack.c.b16 %v1793, %v1777
      %v1922 = vpack.c.b16 %v1794, %v1778
      %v1923 = vpack.c.b16 %v1795, %v1779
      %v1924 = vpack.c.b16 %v1796, %v1780
      %v1925 = vpack.c.b16 %v1813, %v1797
      %v1926 = vpack.c.b16 %v1814, %v1798
      %v1927 = vpack.c.b16 %v1815, %v1799
      %v1928 = vpack.c.b16 %v1816, %v1800
      %v1929 = vpack.c.b16 %v1817, %v1801
      %v1930 = vpack.c.b16 %v1818, %v1802
      %v1931 = vpack.c.b16 %v1819, %v1803
      %v1932 = vpack.c.b16 %v1820, %v1804
      %v1933 = vpack.c.b16 %v1821, %v1805
      %v1934 = vpack.c.b16 %v1822, %v1806
      %v1935 = vpack.c.b16 %v1823, %v1807
      %v1936 = vpack.c.b16 %v1824, %v1808
      %v1937 = vpack.c.b16 %v1825, %v1809
      %v1938 = vpack.c.b16 %v1826, %v1810
      %v1939 = vpack.c.b16 %v1827, %v1811
      %v1940 = vpack.c.b16 %v1828, %v1812
      %v1941 = vpack.c.b16 %v1845, %v1829
      %v1942 = vpack.c.b16 %v1846, %v1830
      %v1943 = vpack.c.b16 %v1847, %v1831
      %v1944 = vpack.c.b16 %v1848, %v1832
      %v1945 = vpack.c.b16 %v1849, %v1833
      %v1946 = vpack.c.b16 %v1850, %v1834
      %v1947 = vpack.c.b16 %v1851, %v1835
      %v1948 = vpack.c.b16 %v1852, %v1836
      %v1949 = vpack.c.b16 %v1853, %v1837
      %v1950 = vpack.c.b16 %v1854, %v1838
      %v1951 = vpack.c.b16 %v1855, %v1839
      %v1952 = vpack.c.b16 %v1856, %v1840
      %v1953 = vpack.c.b16 %v1857, %v1841
      %v1954 = vpack.c.b16 %v1858, %v1842
      %v1955 = vpack.c.b16 %v1859, %v1843
      %v1956 = vpack.c.b16 %v1860, %v1844
      %v1957 = vpack.c.b16 %v1877, %v1861
      %v1958 = vpack.c.b16 %v1878, %v1862
      %v1959 = vpack.c.b16 %v1879, %v1863
      %v1960 = vpack.c.b16 %v1880, %v1864
      %v1961 = vpack.c.b16 %v1881, %v1865
      %v1962 = vpack.c.b16 %v1882, %v1866
      %v1963 = vpack.c.b16 %v1883, %v1867
      %v1964 = vpack.c.b16 %v1884, %v1868
      %v1965 = vpack.c.b16 %v1885, %v1869
      %v1966 = vpack.c.b16 %v1886, %v1870
      %v1967 = vpack.c.b16 %v1887, %v1871
      %v1968 = vpack.c.b16 %v1888, %v1872
      %v1969 = vpack.c.b16 %v1889, %v1873
      %v1970 = vpack.c.b16 %v1890, %v1874
      %v1971 = vpack.c.b16 %v1891, %v1875
      %v1972 = vpack.c.b16 %v1892, %v1876
      %v1973 = vpack.c.b16 %v1893, %v1893
      %v1974 = vpack.c.b16 %v1894, %v1894
      %v1975 = vpack.c.b16 %v1895, %v1895
      %v1976 = vpack.c.b16 %v1896, %v1896
      %v1977 = vpack.c.b16 %v1897, %v1897
      %v1978 = vpack.c.b16 %v1898, %v1898
      %v1979 = vpack.c.b16 %v1899, %v1899
      %v1980 = vpack.c.b16 %v1900, %v1900
      %v1981 = vpack.c.b16 %v1901, %v1901
      %v1982 = vpack.c.b16 %v1902, %v1902
      %v1983 = vpack.c.b16 %v1903, %v1903
      %v1984 = vpack.c.b16 %v1904, %v1904
      %v1985 = vpack.c.b16 %v1905, %v1905
      %v1986 = vpack.c.b16 %v1906, %v1906
      %v1987 = vpack.c.b16 %v1907, %v1907
      %v1988 = vpack.c.b16 %v1908, %v1908
      %v2054 = vsel %vm701, %v1692, 0
      %v2057 = vsel %vm705, %v1973, 0
      %v2060 = vsel %vm705, %v1974, 0
      %v2063 = vsel %vm705, %v1975, 0
      %v2066 = vsel %vm705, %v1976, 0
      %v2069 = vsel %vm705, %v1977, 0
      %v2072 = vsel %vm705, %v1978, 0
      %v2075 = vsel %vm705, %v1979, 0
      %v2078 = vsel %vm705, %v1980, 0
      %v2081 = vsel %vm705, %v1981, 0
      %v2084 = vsel %vm705, %v1982, 0
      %v2087 = vsel %vm705, %v1983, 0
      %v2090 = vsel %vm705, %v1984, 0
      %v2093 = vsel %vm705, %v1985, 0
      %v2096 = vsel %vm705, %v1986, 0
      %v2099 = vsel %vm705, %v1987, 0
      %v2102 = vsel %vm705, %v1988, 0
      %2104 = vmatpush.bf16.msra.mxu0 0
      %2105 = vmatpush.bf16.msra.mxu0 0
      %2106 = vmatpush.bf16.msra.mxu0 0
      %2107 = vmatpush.bf16.msra.mxu0 %v2057
      %2108 = vmatpush.bf16.msra.mxu0 %v1957
      %2109 = vmatpush.bf16.msra.mxu0 %v1941
      %2110 = vmatpush.bf16.msra.mxu0 %v1925
      %2111 = vmatpush.bf16.msra.mxu0 %v1909
      %2112 = vmatmul.bf16.gmra.mxu0 %v2054
      %v2113 = vpop.f32.mrf.mxu0
      %v2114 = vadd.f32 0.0, %v2113
      %v2115 = vpop.f32.mrf.mxu0
      %v2116 = vadd.f32 0.0, %v2115
      %2117 = vdwg.mxu0
      %2118 = vmatpush.bf16.msra.mxu0 0
      %2119 = vmatpush.bf16.msra.mxu0 0
      %2120 = vmatpush.bf16.msra.mxu0 0
      %2121 = vmatpush.bf16.msra.mxu0 %v2060
      %2122 = vmatpush.bf16.msra.mxu0 %v1958
      %2123 = vmatpush.bf16.msra.mxu0 %v1942
      %2124 = vmatpush.bf16.msra.mxu0 %v1926
      %2125 = vmatpush.bf16.msra.mxu0 %v1910
      %2126 = vmatmul.bf16.gmra.mxu0 %v2054
      %v2127 = vpop.f32.mrf.mxu0
      %v2128 = vadd.f32 0.0, %v2127
      %v2129 = vpop.f32.mrf.mxu0
      %v2130 = vadd.f32 0.0, %v2129
      %2131 = vdwg.mxu0
      %2132 = vmatpush.bf16.msra.mxu0 0
      %2133 = vmatpush.bf16.msra.mxu0 0
      %2134 = vmatpush.bf16.msra.mxu0 0
      %2135 = vmatpush.bf16.msra.mxu0 %v2063
      %2136 = vmatpush.bf16.msra.mxu0 %v1959
      %2137 = vmatpush.bf16.msra.mxu0 %v1943
      %2138 = vmatpush.bf16.msra.mxu0 %v1927
      %2139 = vmatpush.bf16.msra.mxu0 %v1911
      %2140 = vmatmul.bf16.gmra.mxu0 %v2054
      %v2141 = vpop.f32.mrf.mxu0
      %v2142 = vadd.f32 0.0, %v2141
      %v2143 = vpop.f32.mrf.mxu0
      %v2144 = vadd.f32 0.0, %v2143
      %2145 = vdwg.mxu0
      %2146 = vmatpush.bf16.msra.mxu0 0
      %2147 = vmatpush.bf16.msra.mxu0 0
      %2148 = vmatpush.bf16.msra.mxu0 0
      %2149 = vmatpush.bf16.msra.mxu0 %v2066
      %2150 = vmatpush.bf16.msra.mxu0 %v1960
      %2151 = vmatpush.bf16.msra.mxu0 %v1944
      %2152 = vmatpush.bf16.msra.mxu0 %v1928
      %2153 = vmatpush.bf16.msra.mxu0 %v1912
      %2154 = vmatmul.bf16.gmra.mxu0 %v2054
      %v2155 = vpop.f32.mrf.mxu0
      %v2156 = vadd.f32 0.0, %v2155
      %v2157 = vpop.f32.mrf.mxu0
      %v2158 = vadd.f32 0.0, %v2157
      %2159 = vdwg.mxu0
      %2160 = vmatpush.bf16.msra.mxu0 0
      %2161 = vmatpush.bf16.msra.mxu0 0
      %2162 = vmatpush.bf16.msra.mxu0 0
      %2163 = vmatpush.bf16.msra.mxu0 %v2069
      %2164 = vmatpush.bf16.msra.mxu0 %v1961
      %2165 = vmatpush.bf16.msra.mxu0 %v1945
      %2166 = vmatpush.bf16.msra.mxu0 %v1929
      %2167 = vmatpush.bf16.msra.mxu0 %v1913
      %2168 = vmatmul.bf16.gmra.mxu0 %v2054
      %v2169 = vpop.f32.mrf.mxu0
      %v2170 = vadd.f32 0.0, %v2169
      %v2171 = vpop.f32.mrf.mxu0
      %v2172 = vadd.f32 0.0, %v2171
      %2173 = vdwg.mxu0
      %2174 = vmatpush.bf16.msra.mxu0 0
      %2175 = vmatpush.bf16.msra.mxu0 0
      %2176 = vmatpush.bf16.msra.mxu0 0
      %2177 = vmatpush.bf16.msra.mxu0 %v2072
      %2178 = vmatpush.bf16.msra.mxu0 %v1962
      %2179 = vmatpush.bf16.msra.mxu0 %v1946
      %2180 = vmatpush.bf16.msra.mxu0 %v1930
      %2181 = vmatpush.bf16.msra.mxu0 %v1914
      %2182 = vmatmul.bf16.gmra.mxu0 %v2054
      %v2183 = vpop.f32.mrf.mxu0
      %v2184 = vadd.f32 0.0, %v2183
      %v2185 = vpop.f32.mrf.mxu0
      %v2186 = vadd.f32 0.0, %v2185
      %2187 = vdwg.mxu0
      %2188 = vmatpush.bf16.msra.mxu0 0
      %2189 = vmatpush.bf16.msra.mxu0 0
      %2190 = vmatpush.bf16.msra.mxu0 0
      %2191 = vmatpush.bf16.msra.mxu0 %v2075
      %2192 = vmatpush.bf16.msra.mxu0 %v1963
      %2193 = vmatpush.bf16.msra.mxu0 %v1947
      %2194 = vmatpush.bf16.msra.mxu0 %v1931
      %2195 = vmatpush.bf16.msra.mxu0 %v1915
      %2196 = vmatmul.bf16.gmra.mxu0 %v2054
      %v2197 = vpop.f32.mrf.mxu0
      %v2198 = vadd.f32 0.0, %v2197
      %v2199 = vpop.f32.mrf.mxu0
      %v2200 = vadd.f32 0.0, %v2199
      %2201 = vdwg.mxu0
      %2202 = vmatpush.bf16.msra.mxu0 0
      %2203 = vmatpush.bf16.msra.mxu0 0
      %2204 = vmatpush.bf16.msra.mxu0 0
      %2205 = vmatpush.bf16.msra.mxu0 %v2078
      %2206 = vmatpush.bf16.msra.mxu0 %v1964
      %2207 = vmatpush.bf16.msra.mxu0 %v1948
      %2208 = vmatpush.bf16.msra.mxu0 %v1932
      %2209 = vmatpush.bf16.msra.mxu0 %v1916
      %2210 = vmatmul.bf16.gmra.mxu0 %v2054
      %v2211 = vpop.f32.mrf.mxu0
      %v2212 = vadd.f32 0.0, %v2211
      %v2213 = vpop.f32.mrf.mxu0
      %v2214 = vadd.f32 0.0, %v2213
      %2215 = vdwg.mxu0
      %2216 = vmatpush.bf16.msra.mxu0 0
      %2217 = vmatpush.bf16.msra.mxu0 0
      %2218 = vmatpush.bf16.msra.mxu0 0
      %2219 = vmatpush.bf16.msra.mxu0 %v2081
      %2220 = vmatpush.bf16.msra.mxu0 %v1965
      %2221 = vmatpush.bf16.msra.mxu0 %v1949
      %2222 = vmatpush.bf16.msra.mxu0 %v1933
      %2223 = vmatpush.bf16.msra.mxu0 %v1917
      %2224 = vmatmul.bf16.gmra.mxu0 %v2054
      %v2225 = vpop.f32.mrf.mxu0
      %v2226 = vadd.f32 0.0, %v2225
      %v2227 = vpop.f32.mrf.mxu0
      %v2228 = vadd.f32 0.0, %v2227
      %2229 = vdwg.mxu0
      %2230 = vmatpush.bf16.msra.mxu0 0
      %2231 = vmatpush.bf16.msra.mxu0 0
      %2232 = vmatpush.bf16.msra.mxu0 0
      %2233 = vmatpush.bf16.msra.mxu0 %v2084
      %2234 = vmatpush.bf16.msra.mxu0 %v1966
      %2235 = vmatpush.bf16.msra.mxu0 %v1950
      %2236 = vmatpush.bf16.msra.mxu0 %v1934
      %2237 = vmatpush.bf16.msra.mxu0 %v1918
      %2238 = vmatmul.bf16.gmra.mxu0 %v2054
      %v2239 = vpop.f32.mrf.mxu0
      %v2240 = vadd.f32 0.0, %v2239
      %v2241 = vpop.f32.mrf.mxu0
      %v2242 = vadd.f32 0.0, %v2241
      %2243 = vdwg.mxu0
      %2244 = vmatpush.bf16.msra.mxu0 0
      %2245 = vmatpush.bf16.msra.mxu0 0
      %2246 = vmatpush.bf16.msra.mxu0 0
      %2247 = vmatpush.bf16.msra.mxu0 %v2087
      %2248 = vmatpush.bf16.msra.mxu0 %v1967
      %2249 = vmatpush.bf16.msra.mxu0 %v1951
      %2250 = vmatpush.bf16.msra.mxu0 %v1935
      %2251 = vmatpush.bf16.msra.mxu0 %v1919
      %2252 = vmatmul.bf16.gmra.mxu0 %v2054
      %v2253 = vpop.f32.mrf.mxu0
      %v2254 = vadd.f32 0.0, %v2253
      %v2255 = vpop.f32.mrf.mxu0
      %v2256 = vadd.f32 0.0, %v2255
      %2257 = vdwg.mxu0
      %2258 = vmatpush.bf16.msra.mxu0 0
      %2259 = vmatpush.bf16.msra.mxu0 0
      %2260 = vmatpush.bf16.msra.mxu0 0
      %2261 = vmatpush.bf16.msra.mxu0 %v2090
      %2262 = vmatpush.bf16.msra.mxu0 %v1968
      %2263 = vmatpush.bf16.msra.mxu0 %v1952
      %2264 = vmatpush.bf16.msra.mxu0 %v1936
      %2265 = vmatpush.bf16.msra.mxu0 %v1920
      %2266 = vmatmul.bf16.gmra.mxu0 %v2054
      %v2267 = vpop.f32.mrf.mxu0
      %v2268 = vadd.f32 0.0, %v2267
      %v2269 = vpop.f32.mrf.mxu0
      %v2270 = vadd.f32 0.0, %v2269
      %2271 = vdwg.mxu0
      %2272 = vmatpush.bf16.msra.mxu0 0
      %2273 = vmatpush.bf16.msra.mxu0 0
      %2274 = vmatpush.bf16.msra.mxu0 0
      %2275 = vmatpush.bf16.msra.mxu0 %v2093
      %2276 = vmatpush.bf16.msra.mxu0 %v1969
      %2277 = vmatpush.bf16.msra.mxu0 %v1953
      %2278 = vmatpush.bf16.msra.mxu0 %v1937
      %2279 = vmatpush.bf16.msra.mxu0 %v1921
      %2280 = vmatmul.bf16.gmra.mxu0 %v2054
      %v2281 = vpop.f32.mrf.mxu0
      %v2282 = vadd.f32 0.0, %v2281
      %v2283 = vpop.f32.mrf.mxu0
      %v2284 = vadd.f32 0.0, %v2283
      %2285 = vdwg.mxu0
      %2286 = vmatpush.bf16.msra.mxu0 0
      %2287 = vmatpush.bf16.msra.mxu0 0
      %2288 = vmatpush.bf16.msra.mxu0 0
      %2289 = vmatpush.bf16.msra.mxu0 %v2096
      %2290 = vmatpush.bf16.msra.mxu0 %v1970
      %2291 = vmatpush.bf16.msra.mxu0 %v1954
      %2292 = vmatpush.bf16.msra.mxu0 %v1938
      %2293 = vmatpush.bf16.msra.mxu0 %v1922
      %2294 = vmatmul.bf16.gmra.mxu0 %v2054
      %v2295 = vpop.f32.mrf.mxu0
      %v2296 = vadd.f32 0.0, %v2295
      %v2297 = vpop.f32.mrf.mxu0
      %v2298 = vadd.f32 0.0, %v2297
      %2299 = vdwg.mxu0
      %2300 = vmatpush.bf16.msra.mxu0 0
      %2301 = vmatpush.bf16.msra.mxu0 0
      %2302 = vmatpush.bf16.msra.mxu0 0
      %2303 = vmatpush.bf16.msra.mxu0 %v2099
      %2304 = vmatpush.bf16.msra.mxu0 %v1971
      %2305 = vmatpush.bf16.msra.mxu0 %v1955
      %2306 = vmatpush.bf16.msra.mxu0 %v1939
      %2307 = vmatpush.bf16.msra.mxu0 %v1923
      %2308 = vmatmul.bf16.gmra.mxu0 %v2054
      %v2309 = vpop.f32.mrf.mxu0
      %v2310 = vadd.f32 0.0, %v2309
      %v2311 = vpop.f32.mrf.mxu0
      %v2312 = vadd.f32 0.0, %v2311
      %2313 = vdwg.mxu0
      %2314 = vmatpush.bf16.msra.mxu0 0
      %2315 = vmatpush.bf16.msra.mxu0 0
      %2316 = vmatpush.bf16.msra.mxu0 0
      %2317 = vmatpush.bf16.msra.mxu0 %v2102
      %2318 = vmatpush.bf16.msra.mxu0 %v1972
      %2319 = vmatpush.bf16.msra.mxu0 %v1956
      %2320 = vmatpush.bf16.msra.mxu0 %v1940
      %2321 = vmatpush.bf16.msra.mxu0 %v1924
      %2322 = vmatmul.bf16.gmra.mxu0 %v2054
      %v2323 = vpop.f32.mrf.mxu0
      %v2324 = vadd.f32 0.0, %v2323
      %v2325 = vpop.f32.mrf.mxu0
      %v2326 = vadd.f32 0.0, %v2325
      %2327 = vdwg.mxu0
      %v2328 = vadd.f32 %v1398, %v2114
      %v2329 = vadd.f32 %v1412, %v2128
      %v2330 = vadd.f32 %v1426, %v2142
      %v2331 = vadd.f32 %v1440, %v2156
      %v2332 = vadd.f32 %v1454, %v2170
      %v2333 = vadd.f32 %v1468, %v2184
      %v2334 = vadd.f32 %v1482, %v2198
      %v2335 = vadd.f32 %v1496, %v2212
      %v2336 = vadd.f32 %v1510, %v2226
      %v2337 = vadd.f32 %v1524, %v2240
      %v2338 = vadd.f32 %v1538, %v2254
      %v2339 = vadd.f32 %v1552, %v2268
      %v2340 = vadd.f32 %v1566, %v2282
      %v2341 = vadd.f32 %v1580, %v2296
      %v2342 = vadd.f32 %v1594, %v2310
      %v2343 = vadd.f32 %v1608, %v2324
      %v2344 = vadd.f32 %v1400, %v2116
      %v2345 = vadd.f32 %v1414, %v2130
      %v2346 = vadd.f32 %v1428, %v2144
      %v2347 = vadd.f32 %v1442, %v2158
      %v2348 = vadd.f32 %v1456, %v2172
      %v2349 = vadd.f32 %v1470, %v2186
      %v2350 = vadd.f32 %v1484, %v2200
      %v2351 = vadd.f32 %v1498, %v2214
      %v2352 = vadd.f32 %v1512, %v2228
      %v2353 = vadd.f32 %v1526, %v2242
      %v2354 = vadd.f32 %v1540, %v2256
      %v2355 = vadd.f32 %v1554, %v2270
      %v2356 = vadd.f32 %v1568, %v2284
      %v2357 = vadd.f32 %v1582, %v2298
      %v2358 = vadd.f32 %v1596, %v2312
      %v2359 = vadd.f32 %v1610, %v2326
      %v2360 = vld [vmem:[%s2] sm:$0xff]
      %v2361 = vld [vmem:[%s2 + $0x8] sm:$0xff]
      %v2364 = vperm.slane %v2360, 0
      %v2365 = vperm.slane %v2360, 1
      %v2366 = vperm.slane %v2360, 2
      %v2367 = vperm.slane %v2360, 3
      %v2368 = vperm.slane %v2360, 4
      %v2369 = vperm.slane %v2360, 5
      %v2370 = vperm.slane %v2360, 6
      %v2371 = vperm.slane %v2360, 7
      %v2372 = vperm.slane %v2361, 0
      %v2373 = vperm.slane %v2361, 1
      %v2374 = vperm.slane %v2361, 2
      %v2375 = vperm.slane %v2361, 3
      %v2376 = vperm.slane %v2361, 4
      %v2377 = vperm.slane %v2361, 5
      %v2378 = vperm.slane %v2361, 6
      %v2379 = vperm.slane %v2361, 7
      %v2396 = vadd.f32 %v2328, %v2364
      %v2397 = vadd.f32 %v2329, %v2365
      %v2398 = vadd.f32 %v2330, %v2366
      %v2399 = vadd.f32 %v2331, %v2367
      %v2400 = vadd.f32 %v2332, %v2368
      %v2401 = vadd.f32 %v2333, %v2369
      %v2402 = vadd.f32 %v2334, %v2370
      %v2403 = vadd.f32 %v2335, %v2371
      %v2404 = vadd.f32 %v2336, %v2372
      %v2405 = vadd.f32 %v2337, %v2373
      %v2406 = vadd.f32 %v2338, %v2374
      %v2407 = vadd.f32 %v2339, %v2375
      %v2408 = vadd.f32 %v2340, %v2376
      %v2409 = vadd.f32 %v2341, %v2377
      %v2410 = vadd.f32 %v2342, %v2378
      %v2411 = vadd.f32 %v2343, %v2379
      %v2412 = vadd.f32 %v2344, %v2364
      %v2413 = vadd.f32 %v2345, %v2365
      %v2414 = vadd.f32 %v2346, %v2366
      %v2415 = vadd.f32 %v2347, %v2367
      %v2416 = vadd.f32 %v2348, %v2368
      %v2417 = vadd.f32 %v2349, %v2369
      %v2418 = vadd.f32 %v2350, %v2370
      %v2419 = vadd.f32 %v2351, %v2371
      %v2420 = vadd.f32 %v2352, %v2372
      %v2421 = vadd.f32 %v2353, %v2373
      %v2422 = vadd.f32 %v2354, %v2374
      %v2423 = vadd.f32 %v2355, %v2375
      %v2424 = vadd.f32 %v2356, %v2376
      %v2425 = vadd.f32 %v2357, %v2377
      %v2426 = vadd.f32 %v2358, %v2378
      %v2427 = vadd.f32 %v2359, %v2379
      %v2428 = vmax.f32 %v2396, 0.0
      %v2429 = vmax.f32 %v2397, 0.0
      %v2430 = vmax.f32 %v2398, 0.0
      %v2431 = vmax.f32 %v2399, 0.0
      %v2432 = vmax.f32 %v2400, 0.0
      %v2433 = vmax.f32 %v2401, 0.0
      %v2434 = vmax.f32 %v2402, 0.0
      %v2435 = vmax.f32 %v2403, 0.0
      %v2436 = vmax.f32 %v2404, 0.0
      %v2437 = vmax.f32 %v2405, 0.0
      %v2438 = vmax.f32 %v2406, 0.0
      %v2439 = vmax.f32 %v2407, 0.0
      %v2440 = vmax.f32 %v2408, 0.0
      %v2441 = vmax.f32 %v2409, 0.0
      %v2442 = vmax.f32 %v2410, 0.0
      %v2443 = vmax.f32 %v2411, 0.0
      %v2444 = vmax.f32 %v2412, 0.0
      %v2445 = vmax.f32 %v2413, 0.0
      %v2446 = vmax.f32 %v2414, 0.0
      %v2447 = vmax.f32 %v2415, 0.0
      %v2448 = vmax.f32 %v2416, 0.0
      %v2449 = vmax.f32 %v2417, 0.0
      %v2450 = vmax.f32 %v2418, 0.0
      %v2451 = vmax.f32 %v2419, 0.0
      %v2452 = vmax.f32 %v2420, 0.0
      %v2453 = vmax.f32 %v2421, 0.0
      %v2454 = vmax.f32 %v2422, 0.0
      %v2455 = vmax.f32 %v2423, 0.0
      %v2456 = vmax.f32 %v2424, 0.0
      %v2457 = vmax.f32 %v2425, 0.0
      %v2458 = vmax.f32 %v2426, 0.0
      %v2459 = vmax.f32 %v2427, 0.0
      %2460 = vst [vmem:[%s170] sm:$0xff] %v2428
      %2461 = vst [vmem:[%s170 + $0x8] sm:$0xff] %v2429
      %2462 = vst [vmem:[%s170 + $0x10] sm:$0xff] %v2430
      %2463 = vst [vmem:[%s170 + $0x18] sm:$0xff] %v2431
      %2464 = vst [vmem:[%s170 + $0x20] sm:$0xff] %v2432
      %2465 = vst [vmem:[%s170 + $0x28] sm:$0xff] %v2433
      %2466 = vst [vmem:[%s170 + $0x30] sm:$0xff] %v2434
      %2467 = vst [vmem:[%s170 + $0x38] sm:$0xff] %v2435
      %2468 = vst [vmem:[%s170 + $0x40] sm:$0xff] %v2436
      %2469 = vst [vmem:[%s170 + $0x48] sm:$0xff] %v2437
      %2470 = vst [vmem:[%s170 + $0x50] sm:$0xff] %v2438
      %2471 = vst [vmem:[%s170 + $0x58] sm:$0xff] %v2439
      %2472 = vst [vmem:[%s170 + $0x60] sm:$0xff] %v2440
      %2473 = vst [vmem:[%s170 + $0x68] sm:$0xff] %v2441
      %2474 = vst [vmem:[%s170 + $0x70] sm:$0xff] %v2442
      %2475 = vst [vmem:[%s170 + $0x78] sm:$0xff] %v2443
      %2476 = vst [vmem:[%s170 + $0x80] sm:$0xff] %v2444
      %2477 = vst [vmem:[%s170 + $0x88] sm:$0xff] %v2445
      %2478 = vst [vmem:[%s170 + $0x90] sm:$0xff] %v2446
      %2479 = vst [vmem:[%s170 + $0x98] sm:$0xff] %v2447
      %2480 = vst [vmem:[%s170 + $0xa0] sm:$0xff] %v2448
      %2481 = vst [vmem:[%s170 + $0xa8] sm:$0xff] %v2449
      %2482 = vst [vmem:[%s170 + $0xb0] sm:$0xff] %v2450
      %2483 = vst [vmem:[%s170 + $0xb8] sm:$0xff] %v2451
      %2484 = vst [vmem:[%s170 + $0xc0] sm:$0xff] %v2452
      %2485 = vst [vmem:[%s170 + $0xc8] sm:$0xff] %v2453
      %2486 = vst [vmem:[%s170 + $0xd0] sm:$0xff] %v2454
      %2487 = vst [vmem:[%s170 + $0xd8] sm:$0xff] %v2455
      %2488 = vst [vmem:[%s170 + $0xe0] sm:$0xff] %v2456
      %2489 = vst [vmem:[%s170 + $0xe8] sm:$0xff] %v2457
      %2490 = vst [vmem:[%s170 + $0xf0] sm:$0xff] %v2458
      %2491 = vst [vmem:[%s170 + $0xf8] sm:$0xff] %v2459
      %p2492 = scmp.lt.s32.totalorder %s14, 1
      %s2493 = scalar_select %p2492, %s14, 1
      %s2494 = smul.addr %s2493, 32
      %s2495 = smul.addr %s2494, 8
      %s2496 = scalar_lea.vmem %s3, %s2495
      // Predicated region
      $region33: #{downblock_forward.1} parent=31 // pred_check
        %p2497 = pneg %p100
      $region34: #{downblock_forward.1} parent=31 // pred_check_branch
        %2499 = sbr.rel (%p2497) target = $region36
      $region35: #{downblock_forward.1} parent=31 // pred_region
        _
      $region36: #{downblock_forward.1} parent=31 // pred_fallthru
        _
    $region32: #{downblock_forward.1} parent=5 // pred_fallthru
      _
    %p2500 = scmp.le.s32.totalorder 2, %s9
    // Predicated region
    $region37: #{downblock_forward.1} parent=5 // pred_check
      %p2501 = pneg %p2500
    $region38: #{downblock_forward.1} parent=5 // pred_check_branch
      %2503 = sbr.rel (%p2501) target = $region40
    $region39: #{downblock_forward.1} parent=5 // pred_region
      %s2504 = ssub.s32 %s9, 2
      // Predicated region
      $region41: #{downblock_forward.1} parent=39 // pred_check
        %p2505 = pneg %p106
      $region42: #{downblock_forward.1} parent=39 // pred_check_branch
        %2507 = sbr.rel (%p2505) target = $region44
      $region43: #{downblock_forward.1} parent=39 // pred_region
        %p2508 = scmp.lt.s32.totalorder %s15, 1
        %s2509 = scalar_select %p2508, %s15, 1
        %s2510 = smul.addr %s2509, 32
        %s2511 = smul.addr %s2510, 8
        %s2512 = scalar_lea.vmem %s3, %s2511
      $region44: #{downblock_forward.1} parent=39 // pred_fallthru
        _
    $region40: #{downblock_forward.1} parent=5 // pred_fallthru
      _
  $region6: #{downblock_forward.1} parent=0 // loop_footer
    %s13 = sadd.s32 1, %s9
  $region7: #{downblock_forward.1} parent=0 // loop_footer_branch
    %8 = sbr.rel target = $region3
  $region8: #{downblock_forward.1} parent=0 // loop_exit
    _

</llo_original>
